<compile_context>
chip_gen: v7x
topology: tpu7x:2x2x1
jax: 0.10.0
libtpu: 0.0.40
codegen_flags: <defaults>
</compile_context>

<pallas_src>
import jax
import jax.numpy as jnp
import numpy as np
from jax.experimental import pallas as pl
from jax.experimental.pallas import tpu as pltpu

LN_EPS = 1e-5


def _round_up(n, m):
    return ((n + m - 1) // m) * m


def _silu(x):
    return x * jax.nn.sigmoid(x)


def _layernorm(x, gamma, beta):
    # torch nn.LayerNorm over the last dim (biased variance, eps=1e-5), in f32.
    mean = jnp.mean(x, axis=-1, keepdims=True)
    var = jnp.mean(jnp.square(x - mean), axis=-1, keepdims=True)
    return (x - mean) * jax.lax.rsqrt(var + LN_EPS) * gamma + beta


# ------------------------------ fused kernel ------------------------------

def _pure_mlp_kernel(x_ref, inWt_ref, inb_ref,
                     vecs_ref, fc0W_ref, fc0b_ref, fc1Wt_ref,
                     outWt_ref, outb_ref, o_ref):
    Bc, S, Din = x_ref.shape
    L = vecs_ref.shape[0]
    Dout = outWt_ref.shape[1]
    M = Bc * S

    def mxu(a_f32, w_bf16):
        # bf16 MXU fast path, f32 accumulation.
        return jnp.dot(a_f32.astype(jnp.bfloat16), w_bf16,
                       preferred_element_type=jnp.float32)

    # input_fc on the whole batch chunk at once (batch folded into M).
    x = mxu(x_ref[...].reshape(M, Din), inWt_ref[...]) + inb_ref[...]

    def layer(l, x):
        v = vecs_ref[l]      # (8, D) f32: [n0_g, n0_b, n1_g, n1_b, fc1_b, 0, 0, 0]
        w0 = fc0W_ref[l]     # (S, S)  bf16  Conv1d(seq, seq, 1) weight
        b0 = fc0b_ref[l]     # (S, 1)  f32   Conv1d bias (per output seq row)
        w1 = fc1Wt_ref[l]    # (D, D)  bf16  Linear(dim, dim) weight^T

        # fc0: mixes the seq axis per batch row; chunk unrolled with static
        # slices (fc0 is the minor FLOP term; fc1 carries the MXU fill).
        h = _layernorm(x, v[0:1], v[1:2])
        hb = h.astype(jnp.bfloat16)
        h = jnp.concatenate(
            [jnp.dot(w0, hb[b * S:(b + 1) * S, :],
                     preferred_element_type=jnp.float32) + b0
             for b in range(Bc)], axis=0)
        x = x + _silu(h)

        # fc1: Linear(dim, dim), batch folded into M.
        h = _layernorm(x, v[2:3], v[3:4])
        h = mxu(h, w1) + v[4:5]
        x = x + _silu(h)
        return x

    x = jax.lax.fori_loop(0, L, layer, x, unroll=True)

    # output_fc, batch folded into M; lane-dense (Dout padded to 128) store.
    y = mxu(x, outWt_ref[...]) + outb_ref[...]
    o_ref[...] = y.reshape(Bc, S, Dout).astype(o_ref.dtype)


def pure_mlp_pallas(x, p, *, batch_chunk=2):
    B, S, Din = x.shape
    L, _, D = p["vecs"].shape
    Din_p = p["in_Wt"].shape[0]
    Dout_p = p["out_Wt"].shape[1]
    S_p = p["fc0_W"].shape[1]
    Dout = p["dout"]

    batch_chunk = max(1, min(batch_chunk, B))
    B_p = _round_up(B, batch_chunk)
    num_chunks = B_p // batch_chunk

    # Host-side zero padding (exact): batch to a chunk multiple, seq to a
    # sublane multiple, feature dims to lane multiples.
    xp = jnp.zeros((B_p, S_p, Din_p), jnp.float32).at[:B, :S, :Din].set(x)

    bmap = lambda c: (c, 0, 0)     # per-batch-chunk
    cmap2 = lambda c: (0, 0)       # resident constants (DMA'd once)
    cmap3 = lambda c: (0, 0, 0)

    out = pl.pallas_call(
        _pure_mlp_kernel,
        out_shape=jax.ShapeDtypeStruct((B_p, S_p, Dout_p), jnp.float32),
        grid=(num_chunks,),
        in_specs=[
            pl.BlockSpec((batch_chunk, S_p, Din_p), bmap),   # motion_input chunk
            pl.BlockSpec((Din_p, D), cmap2),                 # input_fc weight^T (bf16)
            pl.BlockSpec((1, D), cmap2),                     # input_fc bias (f32)
            pl.BlockSpec((L, 8, D), cmap3),                  # packed LN/fc1-bias vectors
            pl.BlockSpec((L, S_p, S_p), cmap3),              # fc0 (Conv1d) weights (bf16)
            pl.BlockSpec((L, S_p, 1), cmap3),                # fc0 biases (f32)
            pl.BlockSpec((L, D, D), cmap3),                  # fc1 weights^T (bf16)
            pl.BlockSpec((D, Dout_p), cmap2),                # output_fc weight^T (bf16)
            pl.BlockSpec((1, Dout_p), cmap2),                # output_fc bias (f32)
        ],
        out_specs=pl.BlockSpec((batch_chunk, S_p, Dout_p), bmap),
        compiler_params=pltpu.CompilerParams(
            dimension_semantics=("parallel",)),
    )(xp, p["in_Wt"], p["in_b"], p["vecs"], p["fc0_W"], p["fc0_b"],
      p["fc1_Wt"], p["out_Wt"], p["out_b"])

    return out[:B, :S, :Dout]


# ---------------- host-side parameter packing ----------------

def pack_params(p):
    """Transpose / pad / cast the torch-layout params for the kernel."""
    d, din = p["in_W"].shape
    dout = p["out_W"].shape[0]
    s = p["layers"][0]["fc0_W"].shape[0]
    assert d % 128 == 0, "latent_dim must be a lane multiple"

    din_p = _round_up(din, 128)
    dout_p = _round_up(dout, 128)
    s_p = _round_up(s, 8)

    in_Wt = jnp.zeros((din_p, d), jnp.float32).at[:din].set(p["in_W"].T)
    out_Wt = jnp.zeros((d, dout_p), jnp.float32).at[:, :dout].set(p["out_W"].T)
    out_b = jnp.zeros((1, dout_p), jnp.float32).at[0, :dout].set(p["out_b"])

    vecs, fc0_W, fc0_b, fc1_Wt = [], [], [], []
    for lp in p["layers"]:
        v = jnp.zeros((8, d), jnp.float32)
        v = (v.at[0].set(lp["n0_g"]).at[1].set(lp["n0_b"])
              .at[2].set(lp["n1_g"]).at[3].set(lp["n1_b"]).at[4].set(lp["fc1_b"]))
        vecs.append(v)
        w0 = jnp.zeros((s_p, s_p), jnp.float32).at[:s, :s].set(lp["fc0_W"])
        fc0_W.append(w0)
        fc0_b.append(jnp.zeros((s_p, 1), jnp.float32).at[:s, 0].set(lp["fc0_b"]))
        fc1_Wt.append(lp["fc1_W"].T)

    return {
        "in_Wt": in_Wt.astype(jnp.bfloat16),
        "in_b": p["in_b"][None, :],
        "vecs": jnp.stack(vecs),                               # (L, 8, d) f32
        "fc0_W": jnp.stack(fc0_W).astype(jnp.bfloat16),        # (L, s_p, s_p)
        "fc0_b": jnp.stack(fc0_b),                             # (L, s_p, 1) f32
        "fc1_Wt": jnp.stack(fc1_Wt).astype(jnp.bfloat16),      # (L, d, d)
        "out_Wt": out_Wt.astype(jnp.bfloat16),
        "out_b": out_b,
        "dout": dout,
    }


# ---------------- pure-JAX reference (same bf16/f32 arithmetic) ----------------

def _bdot(a, w):
    return jnp.dot(a.astype(jnp.bfloat16), w.astype(jnp.bfloat16),
                   preferred_element_type=jnp.float32)


def pure_mlp_ref(x, p):
    h = _bdot(x, p["in_W"].T) + p["in_b"]
    for lp in p["layers"]:
        v = _layernorm(h, lp["n0_g"], lp["n0_b"])
        v = jnp.einsum("ts,bsd->btd",
                       lp["fc0_W"].astype(jnp.bfloat16),
                       v.astype(jnp.bfloat16),
                       preferred_element_type=jnp.float32) + lp["fc0_b"][None, :, None]
        h = h + _silu(v)
        v = _layernorm(h, lp["n1_g"], lp["n1_b"])
        v = _bdot(v, lp["fc1_W"].T) + lp["fc1_b"]
        h = h + _silu(v)
    return _bdot(h, p["out_W"].T) + p["out_b"]


# ---------------- parameter init (deterministic, synthetic, torch layout) ----------------

def init_params(key, din, d, s, dout, num_layers):
    kin, kout, klay = jax.random.split(key, 3)

    k = jax.random.split(kin, 2)
    in_W = 0.1 * jax.random.normal(k[0], (d, din), jnp.float32)
    in_b = 0.1 * jax.random.normal(k[1], (d,), jnp.float32)

    k = jax.random.split(kout, 2)
    out_W = 0.1 * jax.random.normal(k[0], (dout, d), jnp.float32)
    out_b = 0.1 * jax.random.normal(k[1], (dout,), jnp.float32)

    layers = []
    for i in range(num_layers):
        kk = jax.random.split(jax.random.fold_in(klay, i), 8)
        layers.append(dict(
            n0_g=1.0 + 0.1 * jax.random.normal(kk[0], (d,), jnp.float32),
            n0_b=0.1 * jax.random.normal(kk[1], (d,), jnp.float32),
            n1_g=1.0 + 0.1 * jax.random.normal(kk[2], (d,), jnp.float32),
            n1_b=0.1 * jax.random.normal(kk[3], (d,), jnp.float32),
            fc0_W=0.1 * jax.random.normal(kk[4], (s, s), jnp.float32),
            fc0_b=0.1 * jax.random.normal(kk[5], (s,), jnp.float32),
            fc1_W=0.1 * jax.random.normal(kk[6], (d, d), jnp.float32),
            fc1_b=0.1 * jax.random.normal(kk[7], (d,), jnp.float32),
        ))

    return dict(in_W=in_W, in_b=in_b, out_W=out_W, out_b=out_b, layers=layers)


if __name__ == "__main__":
    # Small shapes consistent with PureMLP(latent_dim, seq, num_layers,
    # input_dim, output_dim).  B=4 with batch_chunk=2 gives a parallel grid of
    # extent 2 (keeps both v7x TensorCores busy) while still folding 2 batch
    # rows into every matmul's M dimension.
    B, S, DIN, D, DOUT, NUM_LAYERS = 4, 8, 24, 128, 64, 3
    BATCH_CHUNK = 2

    key = jax.random.PRNGKey(0)
    kx, kp = jax.random.split(key)
    motion_input = jax.random.normal(kx, (B, S, DIN), jnp.float32)

    logical_params = init_params(kp, DIN, D, S, DOUT, NUM_LAYERS)
    packed_params = pack_params(logical_params)

    out = jax.block_until_ready(
        pure_mlp_pallas(motion_input, packed_params, batch_chunk=BATCH_CHUNK))
    ref = jax.block_until_ready(pure_mlp_ref(motion_input, logical_params))

    np.testing.assert_allclose(np.asarray(out), np.asarray(ref),
                               rtol=2e-3, atol=2e-3)
    assert out.shape == (B, S, DOUT)

    print("KERNEL_OK")
</pallas_src>

<mosaic_0001>
module attributes {stable_mosaic.version = 11 : i64} {
  func.func @_pure_mlp_kernel(%arg0: i32, %arg1: memref<2x8x128xf32, #tpu.memory_space<vmem>>, %arg2: memref<128x128xbf16, #tpu.memory_space<vmem>>, %arg3: memref<1x128xf32, #tpu.memory_space<vmem>>, %arg4: memref<3x8x128xf32, #tpu.memory_space<vmem>>, %arg5: memref<3x8x8xbf16, #tpu.memory_space<vmem>>, %arg6: memref<3x8x1xf32, #tpu.memory_space<vmem>>, %arg7: memref<3x128x128xbf16, #tpu.memory_space<vmem>>, %arg8: memref<128x128xbf16, #tpu.memory_space<vmem>>, %arg9: memref<1x128xf32, #tpu.memory_space<vmem>>, %arg10: memref<2x8x128xf32, #tpu.memory_space<vmem>>) attributes {dimension_semantics = [#tpu.dimension_semantics<parallel>], iteration_bounds = array<i64: 2>, scalar_prefetch = 0 : i64, scratch_operands = 0 : i64, tpu.core_type = #tpu.core_type<tc>, window_params = [{transform_indices = @transform_0, window_bounds = array<i64: 2, 8, 128>}, {pipeline_mode = #tpu.pipeline_mode<synchronous>, transform_indices = @transform_1, window_bounds = array<i64: 128, 128>}, {pipeline_mode = #tpu.pipeline_mode<synchronous>, transform_indices = @transform_2, window_bounds = array<i64: 1, 128>}, {pipeline_mode = #tpu.pipeline_mode<synchronous>, transform_indices = @transform_3, window_bounds = array<i64: 3, 8, 128>}, {pipeline_mode = #tpu.pipeline_mode<synchronous>, transform_indices = @transform_4, window_bounds = array<i64: 3, 8, 8>}, {pipeline_mode = #tpu.pipeline_mode<synchronous>, transform_indices = @transform_5, window_bounds = array<i64: 3, 8, 1>}, {pipeline_mode = #tpu.pipeline_mode<synchronous>, transform_indices = @transform_6, window_bounds = array<i64: 3, 128, 128>}, {pipeline_mode = #tpu.pipeline_mode<synchronous>, transform_indices = @transform_7, window_bounds = array<i64: 128, 128>}, {pipeline_mode = #tpu.pipeline_mode<synchronous>, transform_indices = @transform_8, window_bounds = array<i64: 1, 128>}, {transform_indices = @transform_9, window_bounds = array<i64: 2, 8, 128>}]} {
    %c0 = arith.constant 0 : index
    %c0_0 = arith.constant 0 : index
    %c0_1 = arith.constant 0 : index
    %0 = vector.load %arg1[%c0, %c0_0, %c0_1] : memref<2x8x128xf32, #tpu.memory_space<vmem>>, vector<2x8x128xf32>
    %1 = vector.shape_cast %0 : vector<2x8x128xf32> to vector<16x128xf32>
    %c0_2 = arith.constant 0 : index
    %c0_3 = arith.constant 0 : index
    %2 = vector.load %arg2[%c0_2, %c0_3] : memref<128x128xbf16, #tpu.memory_space<vmem>>, vector<128x128xbf16>
    %3 = arith.truncf %1 : vector<16x128xf32> to vector<16x128xbf16>
    %cst = arith.constant dense<0.000000e+00> : vector<16x128xf32>
    %4 = tpu.matmul %3, %2, %cst {dimension_numbers = #tpu.dot_dimension_numbers<[1], [0], [0], [1], [0, 0, 1, 1], [], []>} : vector<16x128xbf16>, vector<128x128xbf16>, vector<16x128xf32> -> vector<16x128xf32>
    %c0_4 = arith.constant 0 : index
    %c0_5 = arith.constant 0 : index
    %5 = vector.load %arg3[%c0_4, %c0_5] : memref<1x128xf32, #tpu.memory_space<vmem>>, vector<1x128xf32>
    %6 = vector.broadcast %5 : vector<1x128xf32> to vector<16x128xf32>
    %7 = arith.addf %4, %6 : vector<16x128xf32>
    %c0_i32 = arith.constant 0 : i32
    %8 = arith.index_cast %c0_i32 : i32 to index
    %c0_6 = arith.constant 0 : index
    %c0_7 = arith.constant 0 : index
    %9 = vector.load %arg4[%8, %c0_6, %c0_7] : memref<3x8x128xf32, #tpu.memory_space<vmem>>, vector<1x8x128xf32>
    %10 = vector.shape_cast %9 : vector<1x8x128xf32> to vector<8x128xf32>
    %11 = arith.index_cast %c0_i32 : i32 to index
    %c0_8 = arith.constant 0 : index
    %c0_9 = arith.constant 0 : index
    %12 = vector.load %arg5[%11, %c0_8, %c0_9] : memref<3x8x8xbf16, #tpu.memory_space<vmem>>, vector<1x8x8xbf16>
    %13 = vector.shape_cast %12 : vector<1x8x8xbf16> to vector<8x8xbf16>
    %14 = arith.index_cast %c0_i32 : i32 to index
    %c0_10 = arith.constant 0 : index
    %c0_11 = arith.constant 0 : index
    %15 = vector.load %arg6[%14, %c0_10, %c0_11] : memref<3x8x1xf32, #tpu.memory_space<vmem>>, vector<1x8x1xf32>
    %16 = vector.shape_cast %15 : vector<1x8x1xf32> to vector<8x1xf32>
    %17 = arith.index_cast %c0_i32 : i32 to index
    %c0_12 = arith.constant 0 : index
    %c0_13 = arith.constant 0 : index
    %18 = vector.load %arg7[%17, %c0_12, %c0_13] : memref<3x128x128xbf16, #tpu.memory_space<vmem>>, vector<1x128x128xbf16>
    %19 = vector.shape_cast %18 : vector<1x128x128xbf16> to vector<128x128xbf16>
    %20 = vector.extract_strided_slice %10 {offsets = [0, 0], sizes = [1, 128], strides = [1, 1]} : vector<8x128xf32> to vector<1x128xf32>
    %21 = vector.extract_strided_slice %10 {offsets = [1, 0], sizes = [1, 128], strides = [1, 1]} : vector<8x128xf32> to vector<1x128xf32>
    %cst_14 = arith.constant dense<0.000000e+00> : vector<16xf32>
    %22 = vector.multi_reduction <add>, %7, %cst_14 [1] : vector<16x128xf32> to vector<16xf32>
    %23 = vector.shape_cast %22 : vector<16xf32> to vector<16x1xf32>
    %cst_15 = arith.constant 1.280000e+02 : f32
    %24 = vector.broadcast %cst_15 : f32 to vector<16x1xf32>
    %25 = arith.divf %23, %24 : vector<16x1xf32>
    %26 = vector.broadcast %25 : vector<16x1xf32> to vector<16x128xf32>
    %27 = arith.subf %7, %26 : vector<16x128xf32>
    %28 = arith.mulf %27, %27 : vector<16x128xf32>
    %cst_16 = arith.constant dense<0.000000e+00> : vector<16xf32>
    %29 = vector.multi_reduction <add>, %28, %cst_16 [1] : vector<16x128xf32> to vector<16xf32>
    %30 = vector.shape_cast %29 : vector<16xf32> to vector<16x1xf32>
    %cst_17 = arith.constant 1.280000e+02 : f32
    %31 = vector.broadcast %cst_17 : f32 to vector<16x1xf32>
    %32 = arith.divf %30, %31 : vector<16x1xf32>
    %33 = vector.broadcast %25 : vector<16x1xf32> to vector<16x128xf32>
    %34 = arith.subf %7, %33 : vector<16x128xf32>
    %cst_18 = arith.constant 9.99999974E-6 : f32
    %35 = vector.broadcast %cst_18 : f32 to vector<16x1xf32>
    %36 = arith.addf %32, %35 : vector<16x1xf32>
    %37 = math.rsqrt %36 : vector<16x1xf32>
    %38 = vector.broadcast %37 : vector<16x1xf32> to vector<16x128xf32>
    %39 = arith.mulf %34, %38 : vector<16x128xf32>
    %40 = vector.broadcast %20 : vector<1x128xf32> to vector<16x128xf32>
    %41 = arith.mulf %39, %40 : vector<16x128xf32>
    %42 = vector.broadcast %21 : vector<1x128xf32> to vector<16x128xf32>
    %43 = arith.addf %41, %42 : vector<16x128xf32>
    %44 = arith.truncf %43 : vector<16x128xf32> to vector<16x128xbf16>
    %45 = vector.extract_strided_slice %44 {offsets = [0, 0], sizes = [8, 128], strides = [1, 1]} : vector<16x128xbf16> to vector<8x128xbf16>
    %cst_19 = arith.constant dense<0.000000e+00> : vector<8x128xf32>
    %46 = tpu.matmul %13, %45, %cst_19 {dimension_numbers = #tpu.dot_dimension_numbers<[1], [0], [0], [1], [0, 0, 1, 1], [], []>} : vector<8x8xbf16>, vector<8x128xbf16>, vector<8x128xf32> -> vector<8x128xf32>
    %47 = vector.broadcast %16 : vector<8x1xf32> to vector<8x128xf32>
    %48 = arith.addf %46, %47 : vector<8x128xf32>
    %49 = vector.extract_strided_slice %44 {offsets = [8, 0], sizes = [8, 128], strides = [1, 1]} : vector<16x128xbf16> to vector<8x128xbf16>
    %cst_20 = arith.constant dense<0.000000e+00> : vector<8x128xf32>
    %50 = tpu.matmul %13, %49, %cst_20 {dimension_numbers = #tpu.dot_dimension_numbers<[1], [0], [0], [1], [0, 0, 1, 1], [], []>} : vector<8x8xbf16>, vector<8x128xbf16>, vector<8x128xf32> -> vector<8x128xf32>
    %51 = vector.broadcast %16 : vector<8x1xf32> to vector<8x128xf32>
    %52 = arith.addf %50, %51 : vector<8x128xf32>
    %53 = tpu.concatenate %48, %52 in 0 : vector<8x128xf32>, vector<8x128xf32> -> vector<16x128xf32>
    %54 = arith.negf %53 : vector<16x128xf32>
    %55 = math.exp %54 : vector<16x128xf32>
    %cst_21 = arith.constant 1.000000e+00 : f32
    %56 = vector.broadcast %cst_21 : f32 to vector<16x128xf32>
    %57 = arith.addf %56, %55 : vector<16x128xf32>
    %58 = arith.divf %56, %57 : vector<16x128xf32>
    %59 = arith.mulf %53, %58 : vector<16x128xf32>
    %60 = arith.addf %7, %59 : vector<16x128xf32>
    %61 = vector.extract_strided_slice %10 {offsets = [2, 0], sizes = [1, 128], strides = [1, 1]} : vector<8x128xf32> to vector<1x128xf32>
    %62 = vector.extract_strided_slice %10 {offsets = [3, 0], sizes = [1, 128], strides = [1, 1]} : vector<8x128xf32> to vector<1x128xf32>
    %cst_22 = arith.constant dense<0.000000e+00> : vector<16xf32>
    %63 = vector.multi_reduction <add>, %60, %cst_22 [1] : vector<16x128xf32> to vector<16xf32>
    %64 = vector.shape_cast %63 : vector<16xf32> to vector<16x1xf32>
    %cst_23 = arith.constant 1.280000e+02 : f32
    %65 = vector.broadcast %cst_23 : f32 to vector<16x1xf32>
    %66 = arith.divf %64, %65 : vector<16x1xf32>
    %67 = vector.broadcast %66 : vector<16x1xf32> to vector<16x128xf32>
    %68 = arith.subf %60, %67 : vector<16x128xf32>
    %69 = arith.mulf %68, %68 : vector<16x128xf32>
    %cst_24 = arith.constant dense<0.000000e+00> : vector<16xf32>
    %70 = vector.multi_reduction <add>, %69, %cst_24 [1] : vector<16x128xf32> to vector<16xf32>
    %71 = vector.shape_cast %70 : vector<16xf32> to vector<16x1xf32>
    %cst_25 = arith.constant 1.280000e+02 : f32
    %72 = vector.broadcast %cst_25 : f32 to vector<16x1xf32>
    %73 = arith.divf %71, %72 : vector<16x1xf32>
    %74 = vector.broadcast %66 : vector<16x1xf32> to vector<16x128xf32>
    %75 = arith.subf %60, %74 : vector<16x128xf32>
    %cst_26 = arith.constant 9.99999974E-6 : f32
    %76 = vector.broadcast %cst_26 : f32 to vector<16x1xf32>
    %77 = arith.addf %73, %76 : vector<16x1xf32>
    %78 = math.rsqrt %77 : vector<16x1xf32>
    %79 = vector.broadcast %78 : vector<16x1xf32> to vector<16x128xf32>
    %80 = arith.mulf %75, %79 : vector<16x128xf32>
    %81 = vector.broadcast %61 : vector<1x128xf32> to vector<16x128xf32>
    %82 = arith.mulf %80, %81 : vector<16x128xf32>
    %83 = vector.broadcast %62 : vector<1x128xf32> to vector<16x128xf32>
    %84 = arith.addf %82, %83 : vector<16x128xf32>
    %85 = arith.truncf %84 : vector<16x128xf32> to vector<16x128xbf16>
    %cst_27 = arith.constant dense<0.000000e+00> : vector<16x128xf32>
    %86 = tpu.matmul %85, %19, %cst_27 {dimension_numbers = #tpu.dot_dimension_numbers<[1], [0], [0], [1], [0, 0, 1, 1], [], []>} : vector<16x128xbf16>, vector<128x128xbf16>, vector<16x128xf32> -> vector<16x128xf32>
    %87 = vector.extract_strided_slice %10 {offsets = [4, 0], sizes = [1, 128], strides = [1, 1]} : vector<8x128xf32> to vector<1x128xf32>
    %88 = vector.broadcast %87 : vector<1x128xf32> to vector<16x128xf32>
    %89 = arith.addf %86, %88 : vector<16x128xf32>
    %90 = arith.negf %89 : vector<16x128xf32>
    %91 = math.exp %90 : vector<16x128xf32>
    %cst_28 = arith.constant 1.000000e+00 : f32
    %92 = vector.broadcast %cst_28 : f32 to vector<16x128xf32>
    %93 = arith.addf %92, %91 : vector<16x128xf32>
    %94 = arith.divf %92, %93 : vector<16x128xf32>
    %95 = arith.mulf %89, %94 : vector<16x128xf32>
    %96 = arith.addf %60, %95 : vector<16x128xf32>
    %c1_i32 = arith.constant 1 : i32
    %97 = arith.index_cast %c1_i32 : i32 to index
    %c0_29 = arith.constant 0 : index
    %c0_30 = arith.constant 0 : index
    %98 = vector.load %arg4[%97, %c0_29, %c0_30] : memref<3x8x128xf32, #tpu.memory_space<vmem>>, vector<1x8x128xf32>
    %99 = vector.shape_cast %98 : vector<1x8x128xf32> to vector<8x128xf32>
    %100 = arith.index_cast %c1_i32 : i32 to index
    %c0_31 = arith.constant 0 : index
    %c0_32 = arith.constant 0 : index
    %101 = vector.load %arg5[%100, %c0_31, %c0_32] : memref<3x8x8xbf16, #tpu.memory_space<vmem>>, vector<1x8x8xbf16>
    %102 = vector.shape_cast %101 : vector<1x8x8xbf16> to vector<8x8xbf16>
    %103 = arith.index_cast %c1_i32 : i32 to index
    %c0_33 = arith.constant 0 : index
    %c0_34 = arith.constant 0 : index
    %104 = vector.load %arg6[%103, %c0_33, %c0_34] : memref<3x8x1xf32, #tpu.memory_space<vmem>>, vector<1x8x1xf32>
    %105 = vector.shape_cast %104 : vector<1x8x1xf32> to vector<8x1xf32>
    %106 = arith.index_cast %c1_i32 : i32 to index
    %c0_35 = arith.constant 0 : index
    %c0_36 = arith.constant 0 : index
    %107 = vector.load %arg7[%106, %c0_35, %c0_36] : memref<3x128x128xbf16, #tpu.memory_space<vmem>>, vector<1x128x128xbf16>
    %108 = vector.shape_cast %107 : vector<1x128x128xbf16> to vector<128x128xbf16>
    %109 = vector.extract_strided_slice %99 {offsets = [0, 0], sizes = [1, 128], strides = [1, 1]} : vector<8x128xf32> to vector<1x128xf32>
    %110 = vector.extract_strided_slice %99 {offsets = [1, 0], sizes = [1, 128], strides = [1, 1]} : vector<8x128xf32> to vector<1x128xf32>
    %cst_37 = arith.constant dense<0.000000e+00> : vector<16xf32>
    %111 = vector.multi_reduction <add>, %96, %cst_37 [1] : vector<16x128xf32> to vector<16xf32>
    %112 = vector.shape_cast %111 : vector<16xf32> to vector<16x1xf32>
    %cst_38 = arith.constant 1.280000e+02 : f32
    %113 = vector.broadcast %cst_38 : f32 to vector<16x1xf32>
    %114 = arith.divf %112, %113 : vector<16x1xf32>
    %115 = vector.broadcast %114 : vector<16x1xf32> to vector<16x128xf32>
    %116 = arith.subf %96, %115 : vector<16x128xf32>
    %117 = arith.mulf %116, %116 : vector<16x128xf32>
    %cst_39 = arith.constant dense<0.000000e+00> : vector<16xf32>
    %118 = vector.multi_reduction <add>, %117, %cst_39 [1] : vector<16x128xf32> to vector<16xf32>
    %119 = vector.shape_cast %118 : vector<16xf32> to vector<16x1xf32>
    %cst_40 = arith.constant 1.280000e+02 : f32
    %120 = vector.broadcast %cst_40 : f32 to vector<16x1xf32>
    %121 = arith.divf %119, %120 : vector<16x1xf32>
    %122 = vector.broadcast %114 : vector<16x1xf32> to vector<16x128xf32>
    %123 = arith.subf %96, %122 : vector<16x128xf32>
    %cst_41 = arith.constant 9.99999974E-6 : f32
    %124 = vector.broadcast %cst_41 : f32 to vector<16x1xf32>
    %125 = arith.addf %121, %124 : vector<16x1xf32>
    %126 = math.rsqrt %125 : vector<16x1xf32>
    %127 = vector.broadcast %126 : vector<16x1xf32> to vector<16x128xf32>
    %128 = arith.mulf %123, %127 : vector<16x128xf32>
    %129 = vector.broadcast %109 : vector<1x128xf32> to vector<16x128xf32>
    %130 = arith.mulf %128, %129 : vector<16x128xf32>
    %131 = vector.broadcast %110 : vector<1x128xf32> to vector<16x128xf32>
    %132 = arith.addf %130, %131 : vector<16x128xf32>
    %133 = arith.truncf %132 : vector<16x128xf32> to vector<16x128xbf16>
    %134 = vector.extract_strided_slice %133 {offsets = [0, 0], sizes = [8, 128], strides = [1, 1]} : vector<16x128xbf16> to vector<8x128xbf16>
    %cst_42 = arith.constant dense<0.000000e+00> : vector<8x128xf32>
    %135 = tpu.matmul %102, %134, %cst_42 {dimension_numbers = #tpu.dot_dimension_numbers<[1], [0], [0], [1], [0, 0, 1, 1], [], []>} : vector<8x8xbf16>, vector<8x128xbf16>, vector<8x128xf32> -> vector<8x128xf32>
    %136 = vector.broadcast %105 : vector<8x1xf32> to vector<8x128xf32>
    %137 = arith.addf %135, %136 : vector<8x128xf32>
    %138 = vector.extract_strided_slice %133 {offsets = [8, 0], sizes = [8, 128], strides = [1, 1]} : vector<16x128xbf16> to vector<8x128xbf16>
    %cst_43 = arith.constant dense<0.000000e+00> : vector<8x128xf32>
    %139 = tpu.matmul %102, %138, %cst_43 {dimension_numbers = #tpu.dot_dimension_numbers<[1], [0], [0], [1], [0, 0, 1, 1], [], []>} : vector<8x8xbf16>, vector<8x128xbf16>, vector<8x128xf32> -> vector<8x128xf32>
    %140 = vector.broadcast %105 : vector<8x1xf32> to vector<8x128xf32>
    %141 = arith.addf %139, %140 : vector<8x128xf32>
    %142 = tpu.concatenate %137, %141 in 0 : vector<8x128xf32>, vector<8x128xf32> -> vector<16x128xf32>
    %143 = arith.negf %142 : vector<16x128xf32>
    %144 = math.exp %143 : vector<16x128xf32>
    %cst_44 = arith.constant 1.000000e+00 : f32
    %145 = vector.broadcast %cst_44 : f32 to vector<16x128xf32>
    %146 = arith.addf %145, %144 : vector<16x128xf32>
    %147 = arith.divf %145, %146 : vector<16x128xf32>
    %148 = arith.mulf %142, %147 : vector<16x128xf32>
    %149 = arith.addf %96, %148 : vector<16x128xf32>
    %150 = vector.extract_strided_slice %99 {offsets = [2, 0], sizes = [1, 128], strides = [1, 1]} : vector<8x128xf32> to vector<1x128xf32>
    %151 = vector.extract_strided_slice %99 {offsets = [3, 0], sizes = [1, 128], strides = [1, 1]} : vector<8x128xf32> to vector<1x128xf32>
    %cst_45 = arith.constant dense<0.000000e+00> : vector<16xf32>
    %152 = vector.multi_reduction <add>, %149, %cst_45 [1] : vector<16x128xf32> to vector<16xf32>
    %153 = vector.shape_cast %152 : vector<16xf32> to vector<16x1xf32>
    %cst_46 = arith.constant 1.280000e+02 : f32
    %154 = vector.broadcast %cst_46 : f32 to vector<16x1xf32>
    %155 = arith.divf %153, %154 : vector<16x1xf32>
    %156 = vector.broadcast %155 : vector<16x1xf32> to vector<16x128xf32>
    %157 = arith.subf %149, %156 : vector<16x128xf32>
    %158 = arith.mulf %157, %157 : vector<16x128xf32>
    %cst_47 = arith.constant dense<0.000000e+00> : vector<16xf32>
    %159 = vector.multi_reduction <add>, %158, %cst_47 [1] : vector<16x128xf32> to vector<16xf32>
    %160 = vector.shape_cast %159 : vector<16xf32> to vector<16x1xf32>
    %cst_48 = arith.constant 1.280000e+02 : f32
    %161 = vector.broadcast %cst_48 : f32 to vector<16x1xf32>
    %162 = arith.divf %160, %161 : vector<16x1xf32>
    %163 = vector.broadcast %155 : vector<16x1xf32> to vector<16x128xf32>
    %164 = arith.subf %149, %163 : vector<16x128xf32>
    %cst_49 = arith.constant 9.99999974E-6 : f32
    %165 = vector.broadcast %cst_49 : f32 to vector<16x1xf32>
    %166 = arith.addf %162, %165 : vector<16x1xf32>
    %167 = math.rsqrt %166 : vector<16x1xf32>
    %168 = vector.broadcast %167 : vector<16x1xf32> to vector<16x128xf32>
    %169 = arith.mulf %164, %168 : vector<16x128xf32>
    %170 = vector.broadcast %150 : vector<1x128xf32> to vector<16x128xf32>
    %171 = arith.mulf %169, %170 : vector<16x128xf32>
    %172 = vector.broadcast %151 : vector<1x128xf32> to vector<16x128xf32>
    %173 = arith.addf %171, %172 : vector<16x128xf32>
    %174 = arith.truncf %173 : vector<16x128xf32> to vector<16x128xbf16>
    %cst_50 = arith.constant dense<0.000000e+00> : vector<16x128xf32>
    %175 = tpu.matmul %174, %108, %cst_50 {dimension_numbers = #tpu.dot_dimension_numbers<[1], [0], [0], [1], [0, 0, 1, 1], [], []>} : vector<16x128xbf16>, vector<128x128xbf16>, vector<16x128xf32> -> vector<16x128xf32>
    %176 = vector.extract_strided_slice %99 {offsets = [4, 0], sizes = [1, 128], strides = [1, 1]} : vector<8x128xf32> to vector<1x128xf32>
    %177 = vector.broadcast %176 : vector<1x128xf32> to vector<16x128xf32>
    %178 = arith.addf %175, %177 : vector<16x128xf32>
    %179 = arith.negf %178 : vector<16x128xf32>
    %180 = math.exp %179 : vector<16x128xf32>
    %cst_51 = arith.constant 1.000000e+00 : f32
    %181 = vector.broadcast %cst_51 : f32 to vector<16x128xf32>
    %182 = arith.addf %181, %180 : vector<16x128xf32>
    %183 = arith.divf %181, %182 : vector<16x128xf32>
    %184 = arith.mulf %178, %183 : vector<16x128xf32>
    %185 = arith.addf %149, %184 : vector<16x128xf32>
    %c2_i32 = arith.constant 2 : i32
    %186 = arith.index_cast %c2_i32 : i32 to index
    %c0_52 = arith.constant 0 : index
    %c0_53 = arith.constant 0 : index
    %187 = vector.load %arg4[%186, %c0_52, %c0_53] : memref<3x8x128xf32, #tpu.memory_space<vmem>>, vector<1x8x128xf32>
    %188 = vector.shape_cast %187 : vector<1x8x128xf32> to vector<8x128xf32>
    %189 = arith.index_cast %c2_i32 : i32 to index
    %c0_54 = arith.constant 0 : index
    %c0_55 = arith.constant 0 : index
    %190 = vector.load %arg5[%189, %c0_54, %c0_55] : memref<3x8x8xbf16, #tpu.memory_space<vmem>>, vector<1x8x8xbf16>
    %191 = vector.shape_cast %190 : vector<1x8x8xbf16> to vector<8x8xbf16>
    %192 = arith.index_cast %c2_i32 : i32 to index
    %c0_56 = arith.constant 0 : index
    %c0_57 = arith.constant 0 : index
    %193 = vector.load %arg6[%192, %c0_56, %c0_57] : memref<3x8x1xf32, #tpu.memory_space<vmem>>, vector<1x8x1xf32>
    %194 = vector.shape_cast %193 : vector<1x8x1xf32> to vector<8x1xf32>
    %195 = arith.index_cast %c2_i32 : i32 to index
    %c0_58 = arith.constant 0 : index
    %c0_59 = arith.constant 0 : index
    %196 = vector.load %arg7[%195, %c0_58, %c0_59] : memref<3x128x128xbf16, #tpu.memory_space<vmem>>, vector<1x128x128xbf16>
    %197 = vector.shape_cast %196 : vector<1x128x128xbf16> to vector<128x128xbf16>
    %198 = vector.extract_strided_slice %188 {offsets = [0, 0], sizes = [1, 128], strides = [1, 1]} : vector<8x128xf32> to vector<1x128xf32>
    %199 = vector.extract_strided_slice %188 {offsets = [1, 0], sizes = [1, 128], strides = [1, 1]} : vector<8x128xf32> to vector<1x128xf32>
    %cst_60 = arith.constant dense<0.000000e+00> : vector<16xf32>
    %200 = vector.multi_reduction <add>, %185, %cst_60 [1] : vector<16x128xf32> to vector<16xf32>
    %201 = vector.shape_cast %200 : vector<16xf32> to vector<16x1xf32>
    %cst_61 = arith.constant 1.280000e+02 : f32
    %202 = vector.broadcast %cst_61 : f32 to vector<16x1xf32>
    %203 = arith.divf %201, %202 : vector<16x1xf32>
    %204 = vector.broadcast %203 : vector<16x1xf32> to vector<16x128xf32>
    %205 = arith.subf %185, %204 : vector<16x128xf32>
    %206 = arith.mulf %205, %205 : vector<16x128xf32>
    %cst_62 = arith.constant dense<0.000000e+00> : vector<16xf32>
    %207 = vector.multi_reduction <add>, %206, %cst_62 [1] : vector<16x128xf32> to vector<16xf32>
    %208 = vector.shape_cast %207 : vector<16xf32> to vector<16x1xf32>
    %cst_63 = arith.constant 1.280000e+02 : f32
    %209 = vector.broadcast %cst_63 : f32 to vector<16x1xf32>
    %210 = arith.divf %208, %209 : vector<16x1xf32>
    %211 = vector.broadcast %203 : vector<16x1xf32> to vector<16x128xf32>
    %212 = arith.subf %185, %211 : vector<16x128xf32>
    %cst_64 = arith.constant 9.99999974E-6 : f32
    %213 = vector.broadcast %cst_64 : f32 to vector<16x1xf32>
    %214 = arith.addf %210, %213 : vector<16x1xf32>
    %215 = math.rsqrt %214 : vector<16x1xf32>
    %216 = vector.broadcast %215 : vector<16x1xf32> to vector<16x128xf32>
    %217 = arith.mulf %212, %216 : vector<16x128xf32>
    %218 = vector.broadcast %198 : vector<1x128xf32> to vector<16x128xf32>
    %219 = arith.mulf %217, %218 : vector<16x128xf32>
    %220 = vector.broadcast %199 : vector<1x128xf32> to vector<16x128xf32>
    %221 = arith.addf %219, %220 : vector<16x128xf32>
    %222 = arith.truncf %221 : vector<16x128xf32> to vector<16x128xbf16>
    %223 = vector.extract_strided_slice %222 {offsets = [0, 0], sizes = [8, 128], strides = [1, 1]} : vector<16x128xbf16> to vector<8x128xbf16>
    %cst_65 = arith.constant dense<0.000000e+00> : vector<8x128xf32>
    %224 = tpu.matmul %191, %223, %cst_65 {dimension_numbers = #tpu.dot_dimension_numbers<[1], [0], [0], [1], [0, 0, 1, 1], [], []>} : vector<8x8xbf16>, vector<8x128xbf16>, vector<8x128xf32> -> vector<8x128xf32>
    %225 = vector.broadcast %194 : vector<8x1xf32> to vector<8x128xf32>
    %226 = arith.addf %224, %225 : vector<8x128xf32>
    %227 = vector.extract_strided_slice %222 {offsets = [8, 0], sizes = [8, 128], strides = [1, 1]} : vector<16x128xbf16> to vector<8x128xbf16>
    %cst_66 = arith.constant dense<0.000000e+00> : vector<8x128xf32>
    %228 = tpu.matmul %191, %227, %cst_66 {dimension_numbers = #tpu.dot_dimension_numbers<[1], [0], [0], [1], [0, 0, 1, 1], [], []>} : vector<8x8xbf16>, vector<8x128xbf16>, vector<8x128xf32> -> vector<8x128xf32>
    %229 = vector.broadcast %194 : vector<8x1xf32> to vector<8x128xf32>
    %230 = arith.addf %228, %229 : vector<8x128xf32>
    %231 = tpu.concatenate %226, %230 in 0 : vector<8x128xf32>, vector<8x128xf32> -> vector<16x128xf32>
    %232 = arith.negf %231 : vector<16x128xf32>
    %233 = math.exp %232 : vector<16x128xf32>
    %cst_67 = arith.constant 1.000000e+00 : f32
    %234 = vector.broadcast %cst_67 : f32 to vector<16x128xf32>
    %235 = arith.addf %234, %233 : vector<16x128xf32>
    %236 = arith.divf %234, %235 : vector<16x128xf32>
    %237 = arith.mulf %231, %236 : vector<16x128xf32>
    %238 = arith.addf %185, %237 : vector<16x128xf32>
    %239 = vector.extract_strided_slice %188 {offsets = [2, 0], sizes = [1, 128], strides = [1, 1]} : vector<8x128xf32> to vector<1x128xf32>
    %240 = vector.extract_strided_slice %188 {offsets = [3, 0], sizes = [1, 128], strides = [1, 1]} : vector<8x128xf32> to vector<1x128xf32>
    %cst_68 = arith.constant dense<0.000000e+00> : vector<16xf32>
    %241 = vector.multi_reduction <add>, %238, %cst_68 [1] : vector<16x128xf32> to vector<16xf32>
    %242 = vector.shape_cast %241 : vector<16xf32> to vector<16x1xf32>
    %cst_69 = arith.constant 1.280000e+02 : f32
    %243 = vector.broadcast %cst_69 : f32 to vector<16x1xf32>
    %244 = arith.divf %242, %243 : vector<16x1xf32>
    %245 = vector.broadcast %244 : vector<16x1xf32> to vector<16x128xf32>
    %246 = arith.subf %238, %245 : vector<16x128xf32>
    %247 = arith.mulf %246, %246 : vector<16x128xf32>
    %cst_70 = arith.constant dense<0.000000e+00> : vector<16xf32>
    %248 = vector.multi_reduction <add>, %247, %cst_70 [1] : vector<16x128xf32> to vector<16xf32>
    %249 = vector.shape_cast %248 : vector<16xf32> to vector<16x1xf32>
    %cst_71 = arith.constant 1.280000e+02 : f32
    %250 = vector.broadcast %cst_71 : f32 to vector<16x1xf32>
    %251 = arith.divf %249, %250 : vector<16x1xf32>
    %252 = vector.broadcast %244 : vector<16x1xf32> to vector<16x128xf32>
    %253 = arith.subf %238, %252 : vector<16x128xf32>
    %cst_72 = arith.constant 9.99999974E-6 : f32
    %254 = vector.broadcast %cst_72 : f32 to vector<16x1xf32>
    %255 = arith.addf %251, %254 : vector<16x1xf32>
    %256 = math.rsqrt %255 : vector<16x1xf32>
    %257 = vector.broadcast %256 : vector<16x1xf32> to vector<16x128xf32>
    %258 = arith.mulf %253, %257 : vector<16x128xf32>
    %259 = vector.broadcast %239 : vector<1x128xf32> to vector<16x128xf32>
    %260 = arith.mulf %258, %259 : vector<16x128xf32>
    %261 = vector.broadcast %240 : vector<1x128xf32> to vector<16x128xf32>
    %262 = arith.addf %260, %261 : vector<16x128xf32>
    %263 = arith.truncf %262 : vector<16x128xf32> to vector<16x128xbf16>
    %cst_73 = arith.constant dense<0.000000e+00> : vector<16x128xf32>
    %264 = tpu.matmul %263, %197, %cst_73 {dimension_numbers = #tpu.dot_dimension_numbers<[1], [0], [0], [1], [0, 0, 1, 1], [], []>} : vector<16x128xbf16>, vector<128x128xbf16>, vector<16x128xf32> -> vector<16x128xf32>
    %265 = vector.extract_strided_slice %188 {offsets = [4, 0], sizes = [1, 128], strides = [1, 1]} : vector<8x128xf32> to vector<1x128xf32>
    %266 = vector.broadcast %265 : vector<1x128xf32> to vector<16x128xf32>
    %267 = arith.addf %264, %266 : vector<16x128xf32>
    %268 = arith.negf %267 : vector<16x128xf32>
    %269 = math.exp %268 : vector<16x128xf32>
    %cst_74 = arith.constant 1.000000e+00 : f32
    %270 = vector.broadcast %cst_74 : f32 to vector<16x128xf32>
    %271 = arith.addf %270, %269 : vector<16x128xf32>
    %272 = arith.divf %270, %271 : vector<16x128xf32>
    %273 = arith.mulf %267, %272 : vector<16x128xf32>
    %274 = arith.addf %238, %273 : vector<16x128xf32>
    %c3_i32 = arith.constant 3 : i32
    %c0_75 = arith.constant 0 : index
    %c0_76 = arith.constant 0 : index
    %275 = vector.load %arg8[%c0_75, %c0_76] : memref<128x128xbf16, #tpu.memory_space<vmem>>, vector<128x128xbf16>
    %276 = arith.truncf %274 : vector<16x128xf32> to vector<16x128xbf16>
    %cst_77 = arith.constant dense<0.000000e+00> : vector<16x128xf32>
    %277 = tpu.matmul %276, %275, %cst_77 {dimension_numbers = #tpu.dot_dimension_numbers<[1], [0], [0], [1], [0, 0, 1, 1], [], []>} : vector<16x128xbf16>, vector<128x128xbf16>, vector<16x128xf32> -> vector<16x128xf32>
    %c0_78 = arith.constant 0 : index
    %c0_79 = arith.constant 0 : index
    %278 = vector.load %arg9[%c0_78, %c0_79] : memref<1x128xf32, #tpu.memory_space<vmem>>, vector<1x128xf32>
    %279 = vector.broadcast %278 : vector<1x128xf32> to vector<16x128xf32>
    %280 = arith.addf %277, %279 : vector<16x128xf32>
    %281 = vector.shape_cast %280 : vector<16x128xf32> to vector<2x8x128xf32>
    %c0_80 = arith.constant 0 : index
    %c0_81 = arith.constant 0 : index
    %c0_82 = arith.constant 0 : index
    %282 = vector.load %arg10[%c0_80, %c0_81, %c0_82] : memref<2x8x128xf32, #tpu.memory_space<vmem>>, vector<2x8x128xf32>
    tpu.vector_store %arg10[%c0_80, %c0_81, %c0_82], %281 {strides = array<i32>} : memref<2x8x128xf32, #tpu.memory_space<vmem>>, vector<2x8x128xf32>,
    return
  }
  func.func @transform_0(%arg0: i32) -> (i32, i32, i32) {
    %c0_i32 = arith.constant 0 : i32
    %c0_i32_0 = arith.constant 0 : i32
    %c0_i32_1 = arith.constant 0 : i32
    return %arg0, %c0_i32, %c0_i32_0 : i32, i32, i32
  }
  func.func @transform_1(%arg0: i32) -> (i32, i32) {
    %c0_i32 = arith.constant 0 : i32
    %c0_i32_0 = arith.constant 0 : i32
    %c0_i32_1 = arith.constant 0 : i32
    return %c0_i32, %c0_i32_0 : i32, i32
  }
  func.func @transform_2(%arg0: i32) -> (i32, i32) {
    %c0_i32 = arith.constant 0 : i32
    %c0_i32_0 = arith.constant 0 : i32
    %c0_i32_1 = arith.constant 0 : i32
    return %c0_i32, %c0_i32_0 : i32, i32
  }
  func.func @transform_3(%arg0: i32) -> (i32, i32, i32) {
    %c0_i32 = arith.constant 0 : i32
    %c0_i32_0 = arith.constant 0 : i32
    %c0_i32_1 = arith.constant 0 : i32
    %c0_i32_2 = arith.constant 0 : i32
    return %c0_i32, %c0_i32_0, %c0_i32_1 : i32, i32, i32
  }
  func.func @transform_4(%arg0: i32) -> (i32, i32, i32) {
    %c0_i32 = arith.constant 0 : i32
    %c0_i32_0 = arith.constant 0 : i32
    %c0_i32_1 = arith.constant 0 : i32
    %c0_i32_2 = arith.constant 0 : i32
    return %c0_i32, %c0_i32_0, %c0_i32_1 : i32, i32, i32
  }
  func.func @transform_5(%arg0: i32) -> (i32, i32, i32) {
    %c0_i32 = arith.constant 0 : i32
    %c0_i32_0 = arith.constant 0 : i32
    %c0_i32_1 = arith.constant 0 : i32
    %c0_i32_2 = arith.constant 0 : i32
    return %c0_i32, %c0_i32_0, %c0_i32_1 : i32, i32, i32
  }
  func.func @transform_6(%arg0: i32) -> (i32, i32, i32) {
    %c0_i32 = arith.constant 0 : i32
    %c0_i32_0 = arith.constant 0 : i32
    %c0_i32_1 = arith.constant 0 : i32
    %c0_i32_2 = arith.constant 0 : i32
    return %c0_i32, %c0_i32_0, %c0_i32_1 : i32, i32, i32
  }
  func.func @transform_7(%arg0: i32) -> (i32, i32) {
    %c0_i32 = arith.constant 0 : i32
    %c0_i32_0 = arith.constant 0 : i32
    %c0_i32_1 = arith.constant 0 : i32
    return %c0_i32, %c0_i32_0 : i32, i32
  }
  func.func @transform_8(%arg0: i32) -> (i32, i32) {
    %c0_i32 = arith.constant 0 : i32
    %c0_i32_0 = arith.constant 0 : i32
    %c0_i32_1 = arith.constant 0 : i32
    return %c0_i32, %c0_i32_0 : i32, i32
  }
  func.func @transform_9(%arg0: i32) -> (i32, i32, i32) {
    %c0_i32 = arith.constant 0 : i32
    %c0_i32_0 = arith.constant 0 : i32
    %c0_i32_1 = arith.constant 0 : i32
    return %arg0, %c0_i32, %c0_i32_0 : i32, i32, i32
  }
}

</mosaic_0001>

<llo_original>
// kernel: tpu_custom_call.1
$region0: #{tpu_custom_call.1}
  #allocation0 [shape = 'u32[]', space=smem, size = 0x4, offset = 0x4, fixed_abs, tag = 'smem constant byte address 0x4 - core index']
  #allocation1 [shape = 'u32[144,128]{1,0:T(1,128)}', space=vmem, size = 0x12000, scoped, tag = 'internal scratch']
  %s0 = inlined_call_operand.hbm [shape: f32[4,8,128], index: 0, kind: input, shape index: {}]
  %s1 = inlined_call_operand.hbm [shape: bf16[128,128], index: 1, kind: input, shape index: {}]
  %s2 = inlined_call_operand.vmem [shape: f32[1,128], index: 2, kind: input, shape index: {}]
  %s3 = inlined_call_operand.vmem [shape: f32[3,8,128], index: 3, kind: input, shape index: {}]
  %s4 = inlined_call_operand.vmem [shape: bf16[3,8,8], index: 4, kind: input, shape index: {}]
  %s5 = inlined_call_operand.vmem [shape: f32[3,8,1], index: 5, kind: input, shape index: {}]
  %s6 = inlined_call_operand.hbm [shape: bf16[3,128,128], index: 6, kind: input, shape index: {}]
  %s7 = inlined_call_operand.hbm [shape: bf16[128,128], index: 7, kind: input, shape index: {}]
  %s8 = inlined_call_operand.vmem [shape: f32[1,128], index: 8, kind: input, shape index: {}]
  %s9 = inlined_call_operand.hbm [shape: f32[4,8,128], index: 9, kind: output, shape index: {}]
  %s10 = sld [smem:[#allocation0]]
  $region85: #{tpu_custom_call.1} parent=0
    _
  %s12 = ssub.s32 1, %s10
  %s13 = scalar_select 0, %s12, %s10
  $region1: #{tpu_custom_call.1} parent=0
    #allocation2 [shape = 'u8[16384]{0}', space=vmem, size = 0x4000, scoped, tag = 'input window, operand 0']
    #allocation3 [shape = 's32[2]{0}', space=sflag, size = 0x8, scoped, tag = 'scoped memory for tpu_custom_call.1']
    #allocation4 [shape = 's32[2]{0}', space=sflag, size = 0x8, scoped, tag = 'scoped memory for tpu_custom_call.1']
    #allocation5 [shape = 'u8[32768]{0}', space=vmem, size = 0x8000, scoped, tag = 'input window, operand 1, single buffered']
    #allocation6 [shape = 's32[1]{0}', space=sflag, size = 0x4, scoped, tag = 'scoped memory for tpu_custom_call.1']
    #allocation7 [shape = 'u8[98304]{0}', space=vmem, size = 0x18000, scoped, tag = 'input window, operand 6, single buffered']
    #allocation8 [shape = 'u8[32768]{0}', space=vmem, size = 0x8000, scoped, tag = 'input window, operand 7, single buffered']
    #allocation9 [shape = 's32[1]{0}', space=sflag, size = 0x4, scoped, tag = 'scoped memory for tpu_custom_call.1']
    #allocation10 [shape = 'u8[16384]{0}', space=vmem, size = 0x4000, scoped, tag = 'output window, operand 0']
    %14 = vsyncpa [#allocation3], 0
    %s15 = scalar_lea.sflag [#allocation3], 1
    %16 = vsyncpa %s15, 0
    %17 = vsyncpa [#allocation6], 0
    %18 = vsyncpa [#allocation9], 0
    %19 = vsyncpa [#allocation4], 0
    %s20 = scalar_lea.sflag [#allocation4], 1
    %21 = vsyncpa %s20, 0
    loop: start=0, step=1, limit=4
    $region2: #{tpu_custom_call.1} parent=1 // loop_pre_header
      _
    $region3: #{tpu_custom_call.1} parent=1 // loop_header
      %s23 = sphi 0, %s27
      %p24 = scmp.ge.s32.totalorder %s23, 4
      %s33 = sphi 0, %s35
      %s36 = sphi 0, %s33
      %s37 = sphi 0, %s36
      %s53 = sphi 0, %s37
      %s57 = sphi 0, %s57
      %s59 = sphi 0, %s57
      %s60 = sphi 0, %s59
      %s74 = sphi 0, %s60
      %s78 = sphi 0, %s78
      %s80 = sphi 0, %s78
      %s81 = sphi 0, %s80
      %s95 = sphi 0, %s81
      %s99 = sphi 0, %s99
      %s101 = sphi 0, %s99
      %s102 = sphi 0, %s101
      %s116 = sphi 0, %s102
      %s120 = sphi 0, %s120
      %s122 = sphi 0, %s120
      %s123 = sphi 0, %s122
      %s137 = sphi 0, %s123
      %s141 = sphi 0, %s141
      %s143 = sphi 0, %s141
      %s144 = sphi 0, %s143
      %s158 = sphi 0, %s144
      %s162 = sphi 0, %s162
      %s164 = sphi 0, %s162
      %s165 = sphi 0, %s164
      %s179 = sphi 0, %s165
      %s183 = sphi 0, %s183
      %s185 = sphi 0, %s183
      %s186 = sphi 0, %s185
      %s200 = sphi 0, %s186
      %s204 = sphi 0, %s204
      %s206 = sphi 0, %s204
      %s207 = sphi 0, %s206
      %s221 = sphi 0, %s207
      %s227 = sphi 0, %s229
      %s230 = sphi 0, %s227
      %s231 = sphi 0, %s230
      %s247 = sphi 0, %s231
    $region4: #{tpu_custom_call.1} parent=1 // loop_header_branch
      %26 = sbr.rel (%p24) target = $region8
    $region5: #{tpu_custom_call.1} parent=1 // loop_body
      %s28 = ssub.s32 %s23, 1
      %s29 = ssub.s32 %s23, 2
      %s30 = sadd.s32 %s23, 1
      %s31 = ssub.s32 %s23, %s30
      %p32 = scmp.eq.s32.totalorder %s31, 0
      %s34 = sadd.s32 %s33, 1
      %s35 = scalar_select %p32, %s33, %s34
      %p38 = pneg %p32
      %p39 = scmp.eq.s32.totalorder %s23, 1
      %p40 = por %p38, %p39
      %p41 = scmp.ne.s32.totalorder %s33, %s36
      %p42 = scmp.eq.s32.totalorder %s23, 0
      %p43 = por %p41, %p42
      %p44 = scmp.ne.s32.totalorder %s33, %s36
      %p45 = scmp.eq.s32.totalorder %s28, 1
      %p46 = por %p44, %p45
      %p47 = scmp.ne.s32.totalorder %s36, %s37
      %p48 = scmp.eq.s32.totalorder %s28, 0
      %p49 = por %p47, %p48
      %p50 = scmp.ne.s32.totalorder %s36, %s37
      %p51 = scmp.eq.s32.totalorder %s29, 1
      %p52 = por %p50, %p51
      %p54 = scmp.ne.s32.totalorder %s37, %s53
      %p55 = scmp.eq.s32.totalorder %s29, 0
      %p56 = por %p54, %p55
      %s58 = sadd.s32 %s57, 1
      %p61 = scmp.eq.s32.totalorder %s23, 1
      %p62 = scmp.ne.s32.totalorder %s57, %s59
      %p63 = scmp.eq.s32.totalorder %s23, 0
      %p64 = por %p62, %p63
      %p65 = scmp.ne.s32.totalorder %s57, %s59
      %p66 = scmp.eq.s32.totalorder %s28, 1
      %p67 = por %p65, %p66
      %p68 = scmp.ne.s32.totalorder %s59, %s60
      %p69 = scmp.eq.s32.totalorder %s28, 0
      %p70 = por %p68, %p69
      %p71 = scmp.ne.s32.totalorder %s59, %s60
      %p72 = scmp.eq.s32.totalorder %s29, 1
      %p73 = por %p71, %p72
      %p75 = scmp.ne.s32.totalorder %s60, %s74
      %p76 = scmp.eq.s32.totalorder %s29, 0
      %p77 = por %p75, %p76
      %s79 = sadd.s32 %s78, 1
      %p82 = scmp.eq.s32.totalorder %s23, 1
      %p83 = scmp.ne.s32.totalorder %s78, %s80
      %p84 = scmp.eq.s32.totalorder %s23, 0
      %p85 = por %p83, %p84
      %p86 = scmp.ne.s32.totalorder %s78, %s80
      %p87 = scmp.eq.s32.totalorder %s28, 1
      %p88 = por %p86, %p87
      %p89 = scmp.ne.s32.totalorder %s80, %s81
      %p90 = scmp.eq.s32.totalorder %s28, 0
      %p91 = por %p89, %p90
      %p92 = scmp.ne.s32.totalorder %s80, %s81
      %p93 = scmp.eq.s32.totalorder %s29, 1
      %p94 = por %p92, %p93
      %p96 = scmp.ne.s32.totalorder %s81, %s95
      %p97 = scmp.eq.s32.totalorder %s29, 0
      %p98 = por %p96, %p97
      %s100 = sadd.s32 %s99, 1
      %p103 = scmp.eq.s32.totalorder %s23, 1
      %p104 = scmp.ne.s32.totalorder %s99, %s101
      %p105 = scmp.eq.s32.totalorder %s23, 0
      %p106 = por %p104, %p105
      %p107 = scmp.ne.s32.totalorder %s99, %s101
      %p108 = scmp.eq.s32.totalorder %s28, 1
      %p109 = por %p107, %p108
      %p110 = scmp.ne.s32.totalorder %s101, %s102
      %p111 = scmp.eq.s32.totalorder %s28, 0
      %p112 = por %p110, %p111
      %p113 = scmp.ne.s32.totalorder %s101, %s102
      %p114 = scmp.eq.s32.totalorder %s29, 1
      %p115 = por %p113, %p114
      %p117 = scmp.ne.s32.totalorder %s102, %s116
      %p118 = scmp.eq.s32.totalorder %s29, 0
      %p119 = por %p117, %p118
      %s121 = sadd.s32 %s120, 1
      %p124 = scmp.eq.s32.totalorder %s23, 1
      %p125 = scmp.ne.s32.totalorder %s120, %s122
      %p126 = scmp.eq.s32.totalorder %s23, 0
      %p127 = por %p125, %p126
      %p128 = scmp.ne.s32.totalorder %s120, %s122
      %p129 = scmp.eq.s32.totalorder %s28, 1
      %p130 = por %p128, %p129
      %p131 = scmp.ne.s32.totalorder %s122, %s123
      %p132 = scmp.eq.s32.totalorder %s28, 0
      %p133 = por %p131, %p132
      %p134 = scmp.ne.s32.totalorder %s122, %s123
      %p135 = scmp.eq.s32.totalorder %s29, 1
      %p136 = por %p134, %p135
      %p138 = scmp.ne.s32.totalorder %s123, %s137
      %p139 = scmp.eq.s32.totalorder %s29, 0
      %p140 = por %p138, %p139
      %s142 = sadd.s32 %s141, 1
      %p145 = scmp.eq.s32.totalorder %s23, 1
      %p146 = scmp.ne.s32.totalorder %s141, %s143
      %p147 = scmp.eq.s32.totalorder %s23, 0
      %p148 = por %p146, %p147
      %p149 = scmp.ne.s32.totalorder %s141, %s143
      %p150 = scmp.eq.s32.totalorder %s28, 1
      %p151 = por %p149, %p150
      %p152 = scmp.ne.s32.totalorder %s143, %s144
      %p153 = scmp.eq.s32.totalorder %s28, 0
      %p154 = por %p152, %p153
      %p155 = scmp.ne.s32.totalorder %s143, %s144
      %p156 = scmp.eq.s32.totalorder %s29, 1
      %p157 = por %p155, %p156
      %p159 = scmp.ne.s32.totalorder %s144, %s158
      %p160 = scmp.eq.s32.totalorder %s29, 0
      %p161 = por %p159, %p160
      %s163 = sadd.s32 %s162, 1
      %p166 = scmp.eq.s32.totalorder %s23, 1
      %p167 = scmp.ne.s32.totalorder %s162, %s164
      %p168 = scmp.eq.s32.totalorder %s23, 0
      %p169 = por %p167, %p168
      %p170 = scmp.ne.s32.totalorder %s162, %s164
      %p171 = scmp.eq.s32.totalorder %s28, 1
      %p172 = por %p170, %p171
      %p173 = scmp.ne.s32.totalorder %s164, %s165
      %p174 = scmp.eq.s32.totalorder %s28, 0
      %p175 = por %p173, %p174
      %p176 = scmp.ne.s32.totalorder %s164, %s165
      %p177 = scmp.eq.s32.totalorder %s29, 1
      %p178 = por %p176, %p177
      %p180 = scmp.ne.s32.totalorder %s165, %s179
      %p181 = scmp.eq.s32.totalorder %s29, 0
      %p182 = por %p180, %p181
      %s184 = sadd.s32 %s183, 1
      %p187 = scmp.eq.s32.totalorder %s23, 1
      %p188 = scmp.ne.s32.totalorder %s183, %s185
      %p189 = scmp.eq.s32.totalorder %s23, 0
      %p190 = por %p188, %p189
      %p191 = scmp.ne.s32.totalorder %s183, %s185
      %p192 = scmp.eq.s32.totalorder %s28, 1
      %p193 = por %p191, %p192
      %p194 = scmp.ne.s32.totalorder %s185, %s186
      %p195 = scmp.eq.s32.totalorder %s28, 0
      %p196 = por %p194, %p195
      %p197 = scmp.ne.s32.totalorder %s185, %s186
      %p198 = scmp.eq.s32.totalorder %s29, 1
      %p199 = por %p197, %p198
      %p201 = scmp.ne.s32.totalorder %s186, %s200
      %p202 = scmp.eq.s32.totalorder %s29, 0
      %p203 = por %p201, %p202
      %s205 = sadd.s32 %s204, 1
      %p208 = scmp.eq.s32.totalorder %s23, 1
      %p209 = scmp.ne.s32.totalorder %s204, %s206
      %p210 = scmp.eq.s32.totalorder %s23, 0
      %p211 = por %p209, %p210
      %p212 = scmp.ne.s32.totalorder %s204, %s206
      %p213 = scmp.eq.s32.totalorder %s28, 1
      %p214 = por %p212, %p213
      %p215 = scmp.ne.s32.totalorder %s206, %s207
      %p216 = scmp.eq.s32.totalorder %s28, 0
      %p217 = por %p215, %p216
      %p218 = scmp.ne.s32.totalorder %s206, %s207
      %p219 = scmp.eq.s32.totalorder %s29, 1
      %p220 = por %p218, %p219
      %p222 = scmp.ne.s32.totalorder %s207, %s221
      %p223 = scmp.eq.s32.totalorder %s29, 0
      %p224 = por %p222, %p223
      %s225 = ssub.s32 %s23, %s30
      %p226 = scmp.eq.s32.totalorder %s225, 0
      %s228 = sadd.s32 %s227, 1
      %s229 = scalar_select %p226, %s227, %s228
      %p232 = pneg %p226
      %p233 = scmp.eq.s32.totalorder %s23, 1
      %p234 = por %p232, %p233
      %p235 = scmp.ne.s32.totalorder %s227, %s230
      %p236 = scmp.eq.s32.totalorder %s23, 0
      %p237 = por %p235, %p236
      %p238 = scmp.ne.s32.totalorder %s227, %s230
      %p239 = scmp.eq.s32.totalorder %s28, 1
      %p240 = por %p238, %p239
      %p241 = scmp.ne.s32.totalorder %s230, %s231
      %p242 = scmp.eq.s32.totalorder %s28, 0
      %p243 = por %p241, %p242
      %p244 = scmp.ne.s32.totalorder %s230, %s231
      %p245 = scmp.eq.s32.totalorder %s29, 1
      %p246 = por %p244, %p245
      %p248 = scmp.ne.s32.totalorder %s231, %s247
      %p249 = scmp.eq.s32.totalorder %s29, 0
      %p250 = por %p248, %p249
      %p251 = scmp.le.s32.totalorder 1, %s23
      %p252 = scmp.lt.s32.totalorder %s23, 3
      %p253 = pnand %p251, %p252
      %p254 = pneg %p253
      // Predicated region
      $region9: #{tpu_custom_call.1} parent=5 // pred_check
        _
      $region10: #{tpu_custom_call.1} parent=5 // pred_check_branch
        %256 = sbr.rel (%p253) target = $region12
      $region11: #{tpu_custom_call.1} parent=5 // pred_region
        %s257 = ssub.s32 %s23, 1
        // Predicated region
        $region13: #{tpu_custom_call.1} parent=11 // pred_check
          %p258 = pneg %p70
        $region14: #{tpu_custom_call.1} parent=11 // pred_check_branch
          %260 = sbr.rel (%p258) target = $region16
        $region15: #{tpu_custom_call.1} parent=11 // pred_region
          %s262 = ssub.s32 1024, 1024
          %263 = vsyncadd [#allocation6], %s262
          %s264 = sshll.u32 [#allocation5], 4
          %s265 = int_to_ptr.vmem [resolvable:$true] %s264
          %270 = dma.hbm_to_vmem [thread:$0]  %s1, 1024, %s265, [#allocation6], 64, 64, 4
        $region16: #{tpu_custom_call.1} parent=11 // pred_fallthru
          _
        // Predicated region
        $region17: #{tpu_custom_call.1} parent=11 // pred_check
          %p271 = pneg %p91
        $region18: #{tpu_custom_call.1} parent=11 // pred_check_branch
          %273 = sbr.rel (%p271) target = $region20
        $region19: #{tpu_custom_call.1} parent=11 // pred_region
          _
        $region20: #{tpu_custom_call.1} parent=11 // pred_fallthru
          _
        // Predicated region
        $region21: #{tpu_custom_call.1} parent=11 // pred_check
          %p274 = pneg %p112
        $region22: #{tpu_custom_call.1} parent=11 // pred_check_branch
          %276 = sbr.rel (%p274) target = $region24
        $region23: #{tpu_custom_call.1} parent=11 // pred_region
          _
        $region24: #{tpu_custom_call.1} parent=11 // pred_fallthru
          _
        // Predicated region
        $region25: #{tpu_custom_call.1} parent=11 // pred_check
          %p277 = pneg %p133
        $region26: #{tpu_custom_call.1} parent=11 // pred_check_branch
          %279 = sbr.rel (%p277) target = $region28
        $region27: #{tpu_custom_call.1} parent=11 // pred_region
          _
        $region28: #{tpu_custom_call.1} parent=11 // pred_fallthru
          _
        // Predicated region
        $region29: #{tpu_custom_call.1} parent=11 // pred_check
          %p280 = pneg %p154
        $region30: #{tpu_custom_call.1} parent=11 // pred_check_branch
          %282 = sbr.rel (%p280) target = $region32
        $region31: #{tpu_custom_call.1} parent=11 // pred_region
          _
        $region32: #{tpu_custom_call.1} parent=11 // pred_fallthru
          _
        // Predicated region
        $region33: #{tpu_custom_call.1} parent=11 // pred_check
          %p283 = pneg %p175
        $region34: #{tpu_custom_call.1} parent=11 // pred_check_branch
          %285 = sbr.rel (%p283) target = $region36
        $region35: #{tpu_custom_call.1} parent=11 // pred_region
          %s287 = ssub.s32 3072, 3072
          %288 = vsyncadd [#allocation6], %s287
          %s289 = sshll.u32 [#allocation7], 4
          %s290 = int_to_ptr.vmem [resolvable:$true] %s289
          %295 = dma.hbm_to_vmem [thread:$0]  %s6, 3072, %s290, [#allocation6], 64, 64, 4
        $region36: #{tpu_custom_call.1} parent=11 // pred_fallthru
          _
        // Predicated region
        $region37: #{tpu_custom_call.1} parent=11 // pred_check
          %p296 = pneg %p196
        $region38: #{tpu_custom_call.1} parent=11 // pred_check_branch
          %298 = sbr.rel (%p296) target = $region40
        $region39: #{tpu_custom_call.1} parent=11 // pred_region
          %s300 = ssub.s32 1024, 1024
          %301 = vsyncadd [#allocation9], %s300
          %s302 = sshll.u32 [#allocation8], 4
          %s303 = int_to_ptr.vmem [resolvable:$true] %s302
          %308 = dma.hbm_to_vmem [thread:$0]  %s7, 1024, %s303, [#allocation9], 64, 64, 4
        $region40: #{tpu_custom_call.1} parent=11 // pred_fallthru
          _
        // Predicated region
        $region41: #{tpu_custom_call.1} parent=11 // pred_check
          %p309 = pneg %p217
        $region42: #{tpu_custom_call.1} parent=11 // pred_check_branch
          %311 = sbr.rel (%p309) target = $region44
        $region43: #{tpu_custom_call.1} parent=11 // pred_region
          _
        $region44: #{tpu_custom_call.1} parent=11 // pred_fallthru
          _
      $region12: #{tpu_custom_call.1} parent=5 // pred_fallthru
        _
      %p312 = scmp.lt.s32.totalorder %s23, 2
      // Predicated region
      $region45: #{tpu_custom_call.1} parent=5 // pred_check
        %p313 = pneg %p312
      $region46: #{tpu_custom_call.1} parent=5 // pred_check_branch
        %315 = sbr.rel (%p313) target = $region48
      $region47: #{tpu_custom_call.1} parent=5 // pred_region
        // Predicated region
        $region49: #{tpu_custom_call.1} parent=47 // pred_check
          %p316 = pneg %p43
        $region50: #{tpu_custom_call.1} parent=47 // pred_check_branch
          %318 = sbr.rel (%p316) target = $region52
        $region51: #{tpu_custom_call.1} parent=47 // pred_region
          %s319 = sand.u32 %s33, 1
          %s320 = scalar_lea.sflag [#allocation3], %s319
          %s321 = sand.u32 %s33, 1
          %s322 = smul.addr %s321, 16
          %s323 = scalar_lea.vmem [#allocation2], %s322
          %s324 = smul.u32 2, %s23
          %s326 = ssub.s32 256, 256
          %327 = vsyncadd %s320, %s326
          %s328 = smul.addr %s324, 128
          %s329 = scalar_lea.hbm %s0, %s328
          %s330 = sshll.u32 %s323, 4
          %s331 = int_to_ptr.vmem [resolvable:$true] %s330
          %336 = dma.hbm_to_vmem [thread:$0]  %s329, 256, %s331, %s320, 128, 128, 8
        $region52: #{tpu_custom_call.1} parent=47 // pred_fallthru
          _
      $region48: #{tpu_custom_call.1} parent=5 // pred_fallthru
        _
      %p337 = scmp.le.s32.totalorder 1, %s23
      %p338 = scmp.lt.s32.totalorder %s23, 3
      %p339 = pnand %p337, %p338
      %p340 = pneg %p339
      // Predicated region
      $region53: #{tpu_custom_call.1} parent=5 // pred_check
        _
      $region54: #{tpu_custom_call.1} parent=5 // pred_check_branch
        %342 = sbr.rel (%p339) target = $region56
      $region55: #{tpu_custom_call.1} parent=5 // pred_region
        %s343 = ssub.s32 %s23, 1
        %s344 = sand.u32 %s36, 1
        %s345 = scalar_lea.sflag [#allocation3], %s344
        %s346 = sand.u32 %s36, 1
        %s347 = smul.addr %s346, 16
        %s348 = scalar_lea.vmem [#allocation2], %s347
        // Predicated region
        $region57: #{tpu_custom_call.1} parent=55 // pred_check
          %p349 = pneg %p49
        $region58: #{tpu_custom_call.1} parent=55 // pred_check_branch
          %351 = sbr.rel (%p349) target = $region60
        $region59: #{tpu_custom_call.1} parent=55 // pred_region
          %352 = dma.done %s345, 256
        $region60: #{tpu_custom_call.1} parent=55 // pred_fallthru
          _
        // Predicated region
        $region61: #{tpu_custom_call.1} parent=55 // pred_check
          %p353 = pneg %p70
        $region62: #{tpu_custom_call.1} parent=55 // pred_check_branch
          %355 = sbr.rel (%p353) target = $region64
        $region63: #{tpu_custom_call.1} parent=55 // pred_region
          %356 = dma.done [#allocation6], 1024
        $region64: #{tpu_custom_call.1} parent=55 // pred_fallthru
          _
        // Predicated region
        $region65: #{tpu_custom_call.1} parent=55 // pred_check
          %p357 = pneg %p175
        $region66: #{tpu_custom_call.1} parent=55 // pred_check_branch
          %359 = sbr.rel (%p357) target = $region68
        $region67: #{tpu_custom_call.1} parent=55 // pred_region
          %360 = dma.done [#allocation6], 3072
        $region68: #{tpu_custom_call.1} parent=55 // pred_fallthru
          _
        // Predicated region
        $region69: #{tpu_custom_call.1} parent=55 // pred_check
          %p361 = pneg %p196
        $region70: #{tpu_custom_call.1} parent=55 // pred_check_branch
          %363 = sbr.rel (%p361) target = $region72
        $region71: #{tpu_custom_call.1} parent=55 // pred_region
          %364 = dma.done [#allocation9], 1024
        $region72: #{tpu_custom_call.1} parent=55 // pred_fallthru
          _
        %s365 = sand.u32 %s36, 1
        %s366 = scalar_lea.sflag [#allocation3], %s365
        %s367 = sand.u32 %s36, 1
        %s368 = smul.addr %s367, 16
        %s369 = scalar_lea.vmem [#allocation2], %s368
        %p370 = pneg %p49
        %p371 = pneg %p46
        %p372 = pneg %p70
        %p373 = pneg %p67
        %p374 = pneg %p91
        %p375 = pneg %p88
        %p376 = pneg %p112
        %p377 = pneg %p109
        %p378 = pneg %p133
        %p379 = pneg %p130
        %p380 = pneg %p154
        %p381 = pneg %p151
        %p382 = pneg %p175
        %p383 = pneg %p172
        %p384 = pneg %p196
        %p385 = pneg %p193
        %p386 = pneg %p217
        %p387 = pneg %p214
        %p388 = pneg %p243
        %p389 = pneg %p240
        %s390 = sand.u32 %s230, 1
        %s391 = scalar_lea.sflag [#allocation4], %s390
        %s392 = sand.u32 %s230, 1
        %s393 = smul.addr %s392, 16
        %s394 = scalar_lea.vmem [#allocation10], %s393
        %s395 = smul.u32 2, %s28
        %s396 = smul.u32 2, %s28
        %v398 = vld [vmem:[%s348] sm:$0xff]
        %v399 = vld [vmem:[%s348 + $0x8] sm:$0xff]
        %v400 = vld [vmem:[#allocation5] sm:$0xf]
        %v401 = vld [vmem:[#allocation5 + $0x4] sm:$0xf]
        %v402 = vld [vmem:[#allocation5 + $0x8] sm:$0xf]
        %v403 = vld [vmem:[#allocation5 + $0xc] sm:$0xf]
        %v404 = vld [vmem:[#allocation5 + $0x10] sm:$0xf]
        %v405 = vld [vmem:[#allocation5 + $0x14] sm:$0xf]
        %v406 = vld [vmem:[#allocation5 + $0x18] sm:$0xf]
        %v407 = vld [vmem:[#allocation5 + $0x1c] sm:$0xf]
        %v408 = vld [vmem:[#allocation5 + $0x20] sm:$0xf]
        %v409 = vld [vmem:[#allocation5 + $0x24] sm:$0xf]
        %v410 = vld [vmem:[#allocation5 + $0x28] sm:$0xf]
        %v411 = vld [vmem:[#allocation5 + $0x2c] sm:$0xf]
        %v412 = vld [vmem:[#allocation5 + $0x30] sm:$0xf]
        %v413 = vld [vmem:[#allocation5 + $0x34] sm:$0xf]
        %v414 = vld [vmem:[#allocation5 + $0x38] sm:$0xf]
        %v415 = vld [vmem:[#allocation5 + $0x3c] sm:$0xf]
        %v416 = vpack.c.bf16 %v399, %v398
        %v417 = vld [vmem:[%s2] sm:$0x1]
        %v419 = vlaneseq
        %v420 = vshrl.u32 %v419, 7
        %v421 = vsub.s32 0, %v420
        %v422 = vrot.slane %v417, %v421
        %v440 = vunpack.c.l.b16 %v400
        %v441 = vunpack.c.l.b16 %v401
        %v442 = vunpack.c.l.b16 %v402
        %v443 = vunpack.c.l.b16 %v403
        %v444 = vunpack.c.l.b16 %v404
        %v445 = vunpack.c.l.b16 %v405
        %v446 = vunpack.c.l.b16 %v406
        %v447 = vunpack.c.l.b16 %v407
        %v448 = vunpack.c.l.b16 %v408
        %v449 = vunpack.c.l.b16 %v409
        %v450 = vunpack.c.l.b16 %v410
        %v451 = vunpack.c.l.b16 %v411
        %v452 = vunpack.c.l.b16 %v412
        %v453 = vunpack.c.l.b16 %v413
        %v454 = vunpack.c.l.b16 %v414
        %v455 = vunpack.c.l.b16 %v415
        %v456 = vpack.c.b16 %v441, %v440
        %v457 = vpack.c.b16 %v443, %v442
        %v458 = vpack.c.b16 %v445, %v444
        %v459 = vpack.c.b16 %v447, %v446
        %v460 = vpack.c.b16 %v449, %v448
        %v461 = vpack.c.b16 %v451, %v450
        %v462 = vpack.c.b16 %v453, %v452
        %v463 = vpack.c.b16 %v455, %v454
        %472 = vmatprep.subr.bf16.mxu0 0
        %473 = vmatpush1.bf16.msra.mxu0 %v456
        %474 = vmatprep.subr.bf16.mxu0 0
        %475 = vmatpush1.bf16.msra.mxu0 %v457
        %476 = vmatprep.subr.bf16.mxu0 0
        %477 = vmatpush1.bf16.msra.mxu0 %v458
        %478 = vmatprep.subr.bf16.mxu0 0
        %479 = vmatpush1.bf16.msra.mxu0 %v459
        %480 = vmatprep.subr.bf16.mxu0 0
        %481 = vmatpush1.bf16.msra.mxu0 %v460
        %482 = vmatprep.subr.bf16.mxu0 0
        %483 = vmatpush1.bf16.msra.mxu0 %v461
        %484 = vmatprep.subr.bf16.mxu0 0
        %485 = vmatpush1.bf16.msra.mxu0 %v462
        %486 = vmatprep.subr.bf16.mxu0 0
        %487 = vmatpush1.bf16.msra.mxu0 %v463
        %488 = vmatprep.subr.bf16.mxu0 0
        %489 = vmatpush1.bf16.msra.mxu0 0
        %490 = vmatprep.subr.bf16.mxu0 0
        %491 = vmatpush1.bf16.msra.mxu0 0
        %492 = vmatprep.subr.bf16.mxu0 0
        %493 = vmatpush1.bf16.msra.mxu0 0
        %494 = vmatprep.subr.bf16.mxu0 0
        %495 = vmatpush1.bf16.msra.mxu0 0
        %496 = vmatprep.subr.bf16.mxu0 0
        %497 = vmatpush1.bf16.msra.mxu0 0
        %498 = vmatprep.subr.bf16.mxu0 0
        %499 = vmatpush1.bf16.msra.mxu0 0
        %500 = vmatprep.subr.bf16.mxu0 0
        %501 = vmatpush1.bf16.msra.mxu0 0
        %502 = vmatprep.subr.bf16.mxu0 0
        %503 = vmatpush1.bf16.msra.mxu0 0
        %504 = vmatprep.mubr.bf16.mxu0 0
        %505 = vmatmul.mubr.bf16.gmra.mrb[0].mxu0 %v416
        %v506 = vpop.f32.mrb[0].mxu0
        %v507 = vadd.f32 %v422, %v506
        %v508 = vpop.f32.mrb[0].mxu0
        %v509 = vpop.f32.mrb[0].mxu0
        %v510 = vadd.f32 %v422, %v509
        %v511 = vpop.f32.mrb[0].mxu0
        %512 = vdwg.mxu0
        %v513 = vld [vmem:[%s3] sm:$0xff]
        %v514 = vld [vmem:[%s4] sm:$0xf]
        %v515 = vld [vmem:[%s5] sm:$0xff]
        %v516 = vld [vmem:[#allocation7] sm:$0xf]
        %v517 = vld [vmem:[#allocation7 + $0x4] sm:$0xf]
        %v518 = vld [vmem:[#allocation7 + $0x8] sm:$0xf]
        %v519 = vld [vmem:[#allocation7 + $0xc] sm:$0xf]
        %v520 = vld [vmem:[#allocation7 + $0x10] sm:$0xf]
        %v521 = vld [vmem:[#allocation7 + $0x14] sm:$0xf]
        %v522 = vld [vmem:[#allocation7 + $0x18] sm:$0xf]
        %v523 = vld [vmem:[#allocation7 + $0x1c] sm:$0xf]
        %v524 = vld [vmem:[#allocation7 + $0x20] sm:$0xf]
        %v525 = vld [vmem:[#allocation7 + $0x24] sm:$0xf]
        %v526 = vld [vmem:[#allocation7 + $0x28] sm:$0xf]
        %v527 = vld [vmem:[#allocation7 + $0x2c] sm:$0xf]
        %v528 = vld [vmem:[#allocation7 + $0x30] sm:$0xf]
        %v529 = vld [vmem:[#allocation7 + $0x34] sm:$0xf]
        %v530 = vld [vmem:[#allocation7 + $0x38] sm:$0xf]
        %v531 = vld [vmem:[#allocation7 + $0x3c] sm:$0xf]
        %532 = vadd.xlane.f32.xlu0 %v507
        %v533 = vpop.xlane.xlu0 %532
        %534 = vadd.xlane.f32.xlu0 %v510
        %v535 = vpop.xlane.xlu0 %534
        %v536 = vrcp.pop 128.0
        %v537 = vmul.f32 %v533, %v536
        %v538 = vmul.f32 %v535, %v536
        %v539 = vsub.f32 %v507, %v537
        %v540 = vsub.f32 %v510, %v538
        %v541 = vmul.f32 %v539, %v539
        %v542 = vmul.f32 %v540, %v540
        %543 = vadd.xlane.f32.xlu0 %v541
        %v544 = vpop.xlane.xlu0 %543
        %545 = vadd.xlane.f32.xlu0 %v542
        %v546 = vpop.xlane.xlu0 %545
        %v547 = vmul.f32 %v544, %v536
        %v548 = vmul.f32 %v546, %v536
        %v549 = vadd.f32 %v547, 1e-05
        %v550 = vadd.f32 %v548, 1e-05
        %v551 = vrsqrt.pop %v549
        %v552 = vrsqrt.pop %v550
        %v553 = vmul.f32 %v539, %v551
        %v554 = vmul.f32 %v540, %v552
        %v555 = vlaneseq
        %v556 = vshrl.u32 %v555, 7
        %v557 = vsub.s32 0, %v556
        %v558 = vrot.slane %v513, %v557
        %v559 = vmul.f32 %v553, %v558
        %v560 = vmul.f32 %v554, %v558
        %v561 = vlaneseq
        %v562 = vshrl.u32 %v561, 7
        %v563 = vsub.s32 1, %v562
        %v564 = vrot.slane %v513, %v563
        %v565 = vadd.f32 %v559, %v564
        %v566 = vadd.f32 %v560, %v564
        %v567 = vpack.c.bf16 %v566, %v565
        %569 = vset.pattern.permute.xlu0 0
        %570 = vperm.xlu0 %569, %v515
        %v571 = vpop.permute.xlu0 %570
        %vm573 = vcmask 64512
        %v575 = vsel %vm573, %v514, 0
        %vm577 = vcmask 1043456
        %v579 = vsel %vm577, %v567, 0
        %581 = vmatprep.subr.bf16.mxu0 0
        %582 = vmatpush1.bf16.msra.mxu0 %v579
        %583 = vmatprep.subr.bf16.mxu0 0
        %584 = vmatpush1.bf16.msra.mxu0 0
        %585 = vmatprep.subr.bf16.mxu0 0
        %586 = vmatpush1.bf16.msra.mxu0 0
        %587 = vmatprep.subr.bf16.mxu0 0
        %588 = vmatpush1.bf16.msra.mxu0 0
        %589 = vmatprep.subr.bf16.mxu0 0
        %590 = vmatpush1.bf16.msra.mxu0 0
        %591 = vmatprep.subr.bf16.mxu0 0
        %592 = vmatpush1.bf16.msra.mxu0 0
        %593 = vmatprep.subr.bf16.mxu0 0
        %594 = vmatpush1.bf16.msra.mxu0 0
        %595 = vmatprep.subr.bf16.mxu0 0
        %596 = vmatpush1.bf16.msra.mxu0 0
        %597 = vmatprep.subr.bf16.mxu0 0
        %598 = vmatpush1.bf16.msra.mxu0 0
        %599 = vmatprep.subr.bf16.mxu0 0
        %600 = vmatpush1.bf16.msra.mxu0 0
        %601 = vmatprep.subr.bf16.mxu0 0
        %602 = vmatpush1.bf16.msra.mxu0 0
        %603 = vmatprep.subr.bf16.mxu0 0
        %604 = vmatpush1.bf16.msra.mxu0 0
        %605 = vmatprep.subr.bf16.mxu0 0
        %606 = vmatpush1.bf16.msra.mxu0 0
        %607 = vmatprep.subr.bf16.mxu0 0
        %608 = vmatpush1.bf16.msra.mxu0 0
        %609 = vmatprep.subr.bf16.mxu0 0
        %610 = vmatpush1.bf16.msra.mxu0 0
        %611 = vmatprep.subr.bf16.mxu0 0
        %612 = vmatpush1.bf16.msra.mxu0 0
        %613 = vmatprep.mubr.bf16.mxu0 0
        %614 = vmatmul.mubr.bf16.gmra.mrb[0].mxu0 %v575
        %v615 = vpop.f32.mrb[0].mxu0
        %v616 = vadd.f32 %v571, %v615
        %v617 = vpop.f32.mrb[0].mxu0
        %v618 = vpop.f32.mrb[0].mxu0
        %v619 = vpop.f32.mrb[0].mxu0
        %620 = vdwg.mxu0
        %v622 = vrot.slane %v567, 4
        %v624 = vsel %vm577, %v622, 0
        %626 = vmatprep.subr.bf16.mxu0 0
        %627 = vmatpush1.bf16.msra.mxu0 %v624
        %628 = vmatprep.subr.bf16.mxu0 0
        %629 = vmatpush1.bf16.msra.mxu0 0
        %630 = vmatprep.subr.bf16.mxu0 0
        %631 = vmatpush1.bf16.msra.mxu0 0
        %632 = vmatprep.subr.bf16.mxu0 0
        %633 = vmatpush1.bf16.msra.mxu0 0
        %634 = vmatprep.subr.bf16.mxu0 0
        %635 = vmatpush1.bf16.msra.mxu0 0
        %636 = vmatprep.subr.bf16.mxu0 0
        %637 = vmatpush1.bf16.msra.mxu0 0
        %638 = vmatprep.subr.bf16.mxu0 0
        %639 = vmatpush1.bf16.msra.mxu0 0
        %640 = vmatprep.subr.bf16.mxu0 0
        %641 = vmatpush1.bf16.msra.mxu0 0
        %642 = vmatprep.subr.bf16.mxu0 0
        %643 = vmatpush1.bf16.msra.mxu0 0
        %644 = vmatprep.subr.bf16.mxu0 0
        %645 = vmatpush1.bf16.msra.mxu0 0
        %646 = vmatprep.subr.bf16.mxu0 0
        %647 = vmatpush1.bf16.msra.mxu0 0
        %648 = vmatprep.subr.bf16.mxu0 0
        %649 = vmatpush1.bf16.msra.mxu0 0
        %650 = vmatprep.subr.bf16.mxu0 0
        %651 = vmatpush1.bf16.msra.mxu0 0
        %652 = vmatprep.subr.bf16.mxu0 0
        %653 = vmatpush1.bf16.msra.mxu0 0
        %654 = vmatprep.subr.bf16.mxu0 0
        %655 = vmatpush1.bf16.msra.mxu0 0
        %656 = vmatprep.subr.bf16.mxu0 0
        %657 = vmatpush1.bf16.msra.mxu0 0
        %658 = vmatprep.mubr.bf16.mxu0 0
        %659 = vmatmul.mubr.bf16.gmra.mrb[0].mxu0 %v575
        %v660 = vpop.f32.mrb[0].mxu0
        %v661 = vadd.f32 %v571, %v660
        %v662 = vpop.f32.mrb[0].mxu0
        %v663 = vpop.f32.mrb[0].mxu0
        %v664 = vpop.f32.mrb[0].mxu0
        %665 = vdwg.mxu0
        %v666 = vxor.u32 %v616, 2147483648
        %v667 = vxor.u32 %v661, 2147483648
        %v668 = vmul.f32 %v666, 1.442695
        %v669 = vpow.pop %v668
        %v670 = vmul.f32 %v667, 1.442695
        %v671 = vpow.pop %v670
        %v672 = vadd.f32 %v669, 1.0
        %v673 = vadd.f32 %v671, 1.0
        %v674 = vrcp.pop %v672
        %v675 = vmul.f32 1.0, %v674
        %v676 = vrcp.pop %v673
        %v677 = vmul.f32 1.0, %v676
        %v678 = vmul.f32 %v616, %v675
        %v679 = vmul.f32 %v661, %v677
        %v680 = vadd.f32 %v507, %v678
        %v681 = vadd.f32 %v510, %v679
        %682 = vadd.xlane.f32.xlu0 %v680
        %v683 = vpop.xlane.xlu0 %682
        %684 = vadd.xlane.f32.xlu0 %v681
        %v685 = vpop.xlane.xlu0 %684
        %v686 = vmul.f32 %v683, %v536
        %v687 = vmul.f32 %v685, %v536
        %v688 = vsub.f32 %v680, %v686
        %v689 = vsub.f32 %v681, %v687
        %v690 = vmul.f32 %v688, %v688
        %v691 = vmul.f32 %v689, %v689
        %692 = vadd.xlane.f32.xlu0 %v690
        %v693 = vpop.xlane.xlu0 %692
        %694 = vadd.xlane.f32.xlu0 %v691
        %v695 = vpop.xlane.xlu0 %694
        %v696 = vmul.f32 %v693, %v536
        %v697 = vmul.f32 %v695, %v536
        %v698 = vadd.f32 %v696, 1e-05
        %v699 = vadd.f32 %v697, 1e-05
        %v700 = vrsqrt.pop %v698
        %v701 = vrsqrt.pop %v699
        %v702 = vmul.f32 %v688, %v700
        %v703 = vmul.f32 %v689, %v701
        %v704 = vlaneseq
        %v705 = vshrl.u32 %v704, 7
        %v706 = vsub.s32 2, %v705
        %v707 = vrot.slane %v513, %v706
        %v708 = vmul.f32 %v702, %v707
        %v709 = vmul.f32 %v703, %v707
        %v710 = vlaneseq
        %v711 = vshrl.u32 %v710, 7
        %v712 = vsub.s32 3, %v711
        %v713 = vrot.slane %v513, %v712
        %v714 = vadd.f32 %v708, %v713
        %v715 = vadd.f32 %v709, %v713
        %v716 = vpack.c.bf16 %v715, %v714
        %v717 = vlaneseq
        %v718 = vshrl.u32 %v717, 7
        %v719 = vsub.s32 4, %v718
        %v720 = vrot.slane %v513, %v719
        %v737 = vunpack.c.l.b16 %v516
        %v738 = vunpack.c.l.b16 %v517
        %v739 = vunpack.c.l.b16 %v518
        %v740 = vunpack.c.l.b16 %v519
        %v741 = vunpack.c.l.b16 %v520
        %v742 = vunpack.c.l.b16 %v521
        %v743 = vunpack.c.l.b16 %v522
        %v744 = vunpack.c.l.b16 %v523
        %v745 = vunpack.c.l.b16 %v524
        %v746 = vunpack.c.l.b16 %v525
        %v747 = vunpack.c.l.b16 %v526
        %v748 = vunpack.c.l.b16 %v527
        %v749 = vunpack.c.l.b16 %v528
        %v750 = vunpack.c.l.b16 %v529
        %v751 = vunpack.c.l.b16 %v530
        %v752 = vunpack.c.l.b16 %v531
        %v753 = vpack.c.b16 %v738, %v737
        %v754 = vpack.c.b16 %v740, %v739
        %v755 = vpack.c.b16 %v742, %v741
        %v756 = vpack.c.b16 %v744, %v743
        %v757 = vpack.c.b16 %v746, %v745
        %v758 = vpack.c.b16 %v748, %v747
        %v759 = vpack.c.b16 %v750, %v749
        %v760 = vpack.c.b16 %v752, %v751
        %769 = vmatprep.subr.bf16.mxu0 0
        %770 = vmatpush1.bf16.msra.mxu0 %v753
        %771 = vmatprep.subr.bf16.mxu0 0
        %772 = vmatpush1.bf16.msra.mxu0 %v754
        %773 = vmatprep.subr.bf16.mxu0 0
        %774 = vmatpush1.bf16.msra.mxu0 %v755
        %775 = vmatprep.subr.bf16.mxu0 0
        %776 = vmatpush1.bf16.msra.mxu0 %v756
        %777 = vmatprep.subr.bf16.mxu0 0
        %778 = vmatpush1.bf16.msra.mxu0 %v757
        %779 = vmatprep.subr.bf16.mxu0 0
        %780 = vmatpush1.bf16.msra.mxu0 %v758
        %781 = vmatprep.subr.bf16.mxu0 0
        %782 = vmatpush1.bf16.msra.mxu0 %v759
        %783 = vmatprep.subr.bf16.mxu0 0
        %784 = vmatpush1.bf16.msra.mxu0 %v760
        %785 = vmatprep.subr.bf16.mxu0 0
        %786 = vmatpush1.bf16.msra.mxu0 0
        %787 = vmatprep.subr.bf16.mxu0 0
        %788 = vmatpush1.bf16.msra.mxu0 0
        %789 = vmatprep.subr.bf16.mxu0 0
        %790 = vmatpush1.bf16.msra.mxu0 0
        %791 = vmatprep.subr.bf16.mxu0 0
        %792 = vmatpush1.bf16.msra.mxu0 0
        %793 = vmatprep.subr.bf16.mxu0 0
        %794 = vmatpush1.bf16.msra.mxu0 0
        %795 = vmatprep.subr.bf16.mxu0 0
        %796 = vmatpush1.bf16.msra.mxu0 0
        %797 = vmatprep.subr.bf16.mxu0 0
        %798 = vmatpush1.bf16.msra.mxu0 0
        %799 = vmatprep.subr.bf16.mxu0 0
        %800 = vmatpush1.bf16.msra.mxu0 0
        %801 = vmatprep.mubr.bf16.mxu0 0
        %802 = vmatmul.mubr.bf16.gmra.mrb[0].mxu0 %v716
        %v803 = vpop.f32.mrb[0].mxu0
        %v804 = vadd.f32 %v720, %v803
        %v805 = vpop.f32.mrb[0].mxu0
        %v806 = vpop.f32.mrb[0].mxu0
        %v807 = vadd.f32 %v720, %v806
        %v808 = vpop.f32.mrb[0].mxu0
        %809 = vdwg.mxu0
        %v810 = vxor.u32 %v804, 2147483648
        %v811 = vxor.u32 %v807, 2147483648
        %v812 = vmul.f32 %v810, 1.442695
        %v813 = vpow.pop %v812
        %v814 = vmul.f32 %v811, 1.442695
        %v815 = vpow.pop %v814
        %v816 = vadd.f32 %v813, 1.0
        %v817 = vadd.f32 %v815, 1.0
        %v818 = vrcp.pop %v816
        %v819 = vmul.f32 1.0, %v818
        %v820 = vrcp.pop %v817
        %v821 = vmul.f32 1.0, %v820
        %v822 = vmul.f32 %v804, %v819
        %v823 = vmul.f32 %v807, %v821
        %v824 = vadd.f32 %v680, %v822
        %v825 = vadd.f32 %v681, %v823
        %s826 = scalar_lea.vmem %s3, 8
        %v827 = vld [vmem:[%s826] sm:$0xff]
        %s828 = scalar_lea.vmem %s4, 4
        %v829 = vld [vmem:[%s828] sm:$0xf]
        %s830 = scalar_lea.vmem %s5, 8
        %v831 = vld [vmem:[%s830] sm:$0xff]
        %s832 = scalar_lea.vmem [#allocation7], 64
        %v833 = vld [vmem:[%s832] sm:$0xf]
        %v834 = vld [vmem:[%s832 + $0x4] sm:$0xf]
        %v835 = vld [vmem:[%s832 + $0x8] sm:$0xf]
        %v836 = vld [vmem:[%s832 + $0xc] sm:$0xf]
        %v837 = vld [vmem:[%s832 + $0x10] sm:$0xf]
        %v838 = vld [vmem:[%s832 + $0x14] sm:$0xf]
        %v839 = vld [vmem:[%s832 + $0x18] sm:$0xf]
        %v840 = vld [vmem:[%s832 + $0x1c] sm:$0xf]
        %v841 = vld [vmem:[%s832 + $0x20] sm:$0xf]
        %v842 = vld [vmem:[%s832 + $0x24] sm:$0xf]
        %v843 = vld [vmem:[%s832 + $0x28] sm:$0xf]
        %v844 = vld [vmem:[%s832 + $0x2c] sm:$0xf]
        %v845 = vld [vmem:[%s832 + $0x30] sm:$0xf]
        %v846 = vld [vmem:[%s832 + $0x34] sm:$0xf]
        %v847 = vld [vmem:[%s832 + $0x38] sm:$0xf]
        %v848 = vld [vmem:[%s832 + $0x3c] sm:$0xf]
        %849 = vadd.xlane.f32.xlu0 %v824
        %v850 = vpop.xlane.xlu0 %849
        %851 = vadd.xlane.f32.xlu0 %v825
        %v852 = vpop.xlane.xlu0 %851
        %v853 = vmul.f32 %v850, %v536
        %v854 = vmul.f32 %v852, %v536
        %v855 = vsub.f32 %v824, %v853
        %v856 = vsub.f32 %v825, %v854
        %v857 = vmul.f32 %v855, %v855
        %v858 = vmul.f32 %v856, %v856
        %859 = vadd.xlane.f32.xlu0 %v857
        %v860 = vpop.xlane.xlu0 %859
        %861 = vadd.xlane.f32.xlu0 %v858
        %v862 = vpop.xlane.xlu0 %861
        %v863 = vmul.f32 %v860, %v536
        %v864 = vmul.f32 %v862, %v536
        %v865 = vadd.f32 %v863, 1e-05
        %v866 = vadd.f32 %v864, 1e-05
        %v867 = vrsqrt.pop %v865
        %v868 = vrsqrt.pop %v866
        %v869 = vmul.f32 %v855, %v867
        %v870 = vmul.f32 %v856, %v868
        %v871 = vlaneseq
        %v872 = vshrl.u32 %v871, 7
        %v873 = vsub.s32 0, %v872
        %v874 = vrot.slane %v827, %v873
        %v875 = vmul.f32 %v869, %v874
        %v876 = vmul.f32 %v870, %v874
        %v877 = vlaneseq
        %v878 = vshrl.u32 %v877, 7
        %v879 = vsub.s32 1, %v878
        %v880 = vrot.slane %v827, %v879
        %v881 = vadd.f32 %v875, %v880
        %v882 = vadd.f32 %v876, %v880
        %v883 = vpack.c.bf16 %v882, %v881
        %885 = vset.pattern.permute.xlu0 0
        %886 = vperm.xlu0 %885, %v831
        %v887 = vpop.permute.xlu0 %886
        %v890 = vsel %vm573, %v829, 0
        %v893 = vsel %vm577, %v883, 0
        %895 = vmatprep.subr.bf16.mxu0 0
        %896 = vmatpush1.bf16.msra.mxu0 %v893
        %897 = vmatprep.subr.bf16.mxu0 0
        %898 = vmatpush1.bf16.msra.mxu0 0
        %899 = vmatprep.subr.bf16.mxu0 0
        %900 = vmatpush1.bf16.msra.mxu0 0
        %901 = vmatprep.subr.bf16.mxu0 0
        %902 = vmatpush1.bf16.msra.mxu0 0
        %903 = vmatprep.subr.bf16.mxu0 0
        %904 = vmatpush1.bf16.msra.mxu0 0
        %905 = vmatprep.subr.bf16.mxu0 0
        %906 = vmatpush1.bf16.msra.mxu0 0
        %907 = vmatprep.subr.bf16.mxu0 0
        %908 = vmatpush1.bf16.msra.mxu0 0
        %909 = vmatprep.subr.bf16.mxu0 0
        %910 = vmatpush1.bf16.msra.mxu0 0
        %911 = vmatprep.subr.bf16.mxu0 0
        %912 = vmatpush1.bf16.msra.mxu0 0
        %913 = vmatprep.subr.bf16.mxu0 0
        %914 = vmatpush1.bf16.msra.mxu0 0
        %915 = vmatprep.subr.bf16.mxu0 0
        %916 = vmatpush1.bf16.msra.mxu0 0
        %917 = vmatprep.subr.bf16.mxu0 0
        %918 = vmatpush1.bf16.msra.mxu0 0
        %919 = vmatprep.subr.bf16.mxu0 0
        %920 = vmatpush1.bf16.msra.mxu0 0
        %921 = vmatprep.subr.bf16.mxu0 0
        %922 = vmatpush1.bf16.msra.mxu0 0
        %923 = vmatprep.subr.bf16.mxu0 0
        %924 = vmatpush1.bf16.msra.mxu0 0
        %925 = vmatprep.subr.bf16.mxu0 0
        %926 = vmatpush1.bf16.msra.mxu0 0
        %927 = vmatprep.mubr.bf16.mxu0 0
        %928 = vmatmul.mubr.bf16.gmra.mrb[0].mxu0 %v890
        %v929 = vpop.f32.mrb[0].mxu0
        %v930 = vadd.f32 %v887, %v929
        %v931 = vpop.f32.mrb[0].mxu0
        %v932 = vpop.f32.mrb[0].mxu0
        %v933 = vpop.f32.mrb[0].mxu0
        %934 = vdwg.mxu0
        %v936 = vrot.slane %v883, 4
        %v938 = vsel %vm577, %v936, 0
        %940 = vmatprep.subr.bf16.mxu0 0
        %941 = vmatpush1.bf16.msra.mxu0 %v938
        %942 = vmatprep.subr.bf16.mxu0 0
        %943 = vmatpush1.bf16.msra.mxu0 0
        %944 = vmatprep.subr.bf16.mxu0 0
        %945 = vmatpush1.bf16.msra.mxu0 0
        %946 = vmatprep.subr.bf16.mxu0 0
        %947 = vmatpush1.bf16.msra.mxu0 0
        %948 = vmatprep.subr.bf16.mxu0 0
        %949 = vmatpush1.bf16.msra.mxu0 0
        %950 = vmatprep.subr.bf16.mxu0 0
        %951 = vmatpush1.bf16.msra.mxu0 0
        %952 = vmatprep.subr.bf16.mxu0 0
        %953 = vmatpush1.bf16.msra.mxu0 0
        %954 = vmatprep.subr.bf16.mxu0 0
        %955 = vmatpush1.bf16.msra.mxu0 0
        %956 = vmatprep.subr.bf16.mxu0 0
        %957 = vmatpush1.bf16.msra.mxu0 0
        %958 = vmatprep.subr.bf16.mxu0 0
        %959 = vmatpush1.bf16.msra.mxu0 0
        %960 = vmatprep.subr.bf16.mxu0 0
        %961 = vmatpush1.bf16.msra.mxu0 0
        %962 = vmatprep.subr.bf16.mxu0 0
        %963 = vmatpush1.bf16.msra.mxu0 0
        %964 = vmatprep.subr.bf16.mxu0 0
        %965 = vmatpush1.bf16.msra.mxu0 0
        %966 = vmatprep.subr.bf16.mxu0 0
        %967 = vmatpush1.bf16.msra.mxu0 0
        %968 = vmatprep.subr.bf16.mxu0 0
        %969 = vmatpush1.bf16.msra.mxu0 0
        %970 = vmatprep.subr.bf16.mxu0 0
        %971 = vmatpush1.bf16.msra.mxu0 0
        %972 = vmatprep.mubr.bf16.mxu0 0
        %973 = vmatmul.mubr.bf16.gmra.mrb[0].mxu0 %v890
        %v974 = vpop.f32.mrb[0].mxu0
        %v975 = vadd.f32 %v887, %v974
        %v976 = vpop.f32.mrb[0].mxu0
        %v977 = vpop.f32.mrb[0].mxu0
        %v978 = vpop.f32.mrb[0].mxu0
        %979 = vdwg.mxu0
        %v980 = vxor.u32 %v930, 2147483648
        %v981 = vxor.u32 %v975, 2147483648
        %v982 = vmul.f32 %v980, 1.442695
        %v983 = vpow.pop %v982
        %v984 = vmul.f32 %v981, 1.442695
        %v985 = vpow.pop %v984
        %v986 = vadd.f32 %v983, 1.0
        %v987 = vadd.f32 %v985, 1.0
        %v988 = vrcp.pop %v986
        %v989 = vmul.f32 1.0, %v988
        %v990 = vrcp.pop %v987
        %v991 = vmul.f32 1.0, %v990
        %v992 = vmul.f32 %v930, %v989
        %v993 = vmul.f32 %v975, %v991
        %v994 = vadd.f32 %v824, %v992
        %v995 = vadd.f32 %v825, %v993
        %996 = vadd.xlane.f32.xlu0 %v994
        %v997 = vpop.xlane.xlu0 %996
        %998 = vadd.xlane.f32.xlu0 %v995
        %v999 = vpop.xlane.xlu0 %998
        %v1000 = vmul.f32 %v997, %v536
        %v1001 = vmul.f32 %v999, %v536
        %v1002 = vsub.f32 %v994, %v1000
        %v1003 = vsub.f32 %v995, %v1001
        %v1004 = vmul.f32 %v1002, %v1002
        %v1005 = vmul.f32 %v1003, %v1003
        %1006 = vadd.xlane.f32.xlu0 %v1004
        %v1007 = vpop.xlane.xlu0 %1006
        %1008 = vadd.xlane.f32.xlu0 %v1005
        %v1009 = vpop.xlane.xlu0 %1008
        %v1010 = vmul.f32 %v1007, %v536
        %v1011 = vmul.f32 %v1009, %v536
        %v1012 = vadd.f32 %v1010, 1e-05
        %v1013 = vadd.f32 %v1011, 1e-05
        %v1014 = vrsqrt.pop %v1012
        %v1015 = vrsqrt.pop %v1013
        %v1016 = vmul.f32 %v1002, %v1014
        %v1017 = vmul.f32 %v1003, %v1015
        %v1018 = vlaneseq
        %v1019 = vshrl.u32 %v1018, 7
        %v1020 = vsub.s32 2, %v1019
        %v1021 = vrot.slane %v827, %v1020
        %v1022 = vmul.f32 %v1016, %v1021
        %v1023 = vmul.f32 %v1017, %v1021
        %v1024 = vlaneseq
        %v1025 = vshrl.u32 %v1024, 7
        %v1026 = vsub.s32 3, %v1025
        %v1027 = vrot.slane %v827, %v1026
        %v1028 = vadd.f32 %v1022, %v1027
        %v1029 = vadd.f32 %v1023, %v1027
        %v1030 = vpack.c.bf16 %v1029, %v1028
        %v1031 = vlaneseq
        %v1032 = vshrl.u32 %v1031, 7
        %v1033 = vsub.s32 4, %v1032
        %v1034 = vrot.slane %v827, %v1033
        %v1051 = vunpack.c.l.b16 %v833
        %v1052 = vunpack.c.l.b16 %v834
        %v1053 = vunpack.c.l.b16 %v835
        %v1054 = vunpack.c.l.b16 %v836
        %v1055 = vunpack.c.l.b16 %v837
        %v1056 = vunpack.c.l.b16 %v838
        %v1057 = vunpack.c.l.b16 %v839
        %v1058 = vunpack.c.l.b16 %v840
        %v1059 = vunpack.c.l.b16 %v841
        %v1060 = vunpack.c.l.b16 %v842
        %v1061 = vunpack.c.l.b16 %v843
        %v1062 = vunpack.c.l.b16 %v844
        %v1063 = vunpack.c.l.b16 %v845
        %v1064 = vunpack.c.l.b16 %v846
        %v1065 = vunpack.c.l.b16 %v847
        %v1066 = vunpack.c.l.b16 %v848
        %v1067 = vpack.c.b16 %v1052, %v1051
        %v1068 = vpack.c.b16 %v1054, %v1053
        %v1069 = vpack.c.b16 %v1056, %v1055
        %v1070 = vpack.c.b16 %v1058, %v1057
        %v1071 = vpack.c.b16 %v1060, %v1059
        %v1072 = vpack.c.b16 %v1062, %v1061
        %v1073 = vpack.c.b16 %v1064, %v1063
        %v1074 = vpack.c.b16 %v1066, %v1065
        %1083 = vmatprep.subr.bf16.mxu0 0
        %1084 = vmatpush1.bf16.msra.mxu0 %v1067
        %1085 = vmatprep.subr.bf16.mxu0 0
        %1086 = vmatpush1.bf16.msra.mxu0 %v1068
        %1087 = vmatprep.subr.bf16.mxu0 0
        %1088 = vmatpush1.bf16.msra.mxu0 %v1069
        %1089 = vmatprep.subr.bf16.mxu0 0
        %1090 = vmatpush1.bf16.msra.mxu0 %v1070
        %1091 = vmatprep.subr.bf16.mxu0 0
        %1092 = vmatpush1.bf16.msra.mxu0 %v1071
        %1093 = vmatprep.subr.bf16.mxu0 0
        %1094 = vmatpush1.bf16.msra.mxu0 %v1072
        %1095 = vmatprep.subr.bf16.mxu0 0
        %1096 = vmatpush1.bf16.msra.mxu0 %v1073
        %1097 = vmatprep.subr.bf16.mxu0 0
        %1098 = vmatpush1.bf16.msra.mxu0 %v1074
        %1099 = vmatprep.subr.bf16.mxu0 0
        %1100 = vmatpush1.bf16.msra.mxu0 0
        %1101 = vmatprep.subr.bf16.mxu0 0
        %1102 = vmatpush1.bf16.msra.mxu0 0
        %1103 = vmatprep.subr.bf16.mxu0 0
        %1104 = vmatpush1.bf16.msra.mxu0 0
        %1105 = vmatprep.subr.bf16.mxu0 0
        %1106 = vmatpush1.bf16.msra.mxu0 0
        %1107 = vmatprep.subr.bf16.mxu0 0
        %1108 = vmatpush1.bf16.msra.mxu0 0
        %1109 = vmatprep.subr.bf16.mxu0 0
        %1110 = vmatpush1.bf16.msra.mxu0 0
        %1111 = vmatprep.subr.bf16.mxu0 0
        %1112 = vmatpush1.bf16.msra.mxu0 0
        %1113 = vmatprep.subr.bf16.mxu0 0
        %1114 = vmatpush1.bf16.msra.mxu0 0
        %1115 = vmatprep.mubr.bf16.mxu0 0
        %1116 = vmatmul.mubr.bf16.gmra.mrb[0].mxu0 %v1030
        %v1117 = vpop.f32.mrb[0].mxu0
        %v1118 = vadd.f32 %v1034, %v1117
        %v1119 = vpop.f32.mrb[0].mxu0
        %v1120 = vpop.f32.mrb[0].mxu0
        %v1121 = vadd.f32 %v1034, %v1120
        %v1122 = vpop.f32.mrb[0].mxu0
        %1123 = vdwg.mxu0
        %v1124 = vxor.u32 %v1118, 2147483648
        %v1125 = vxor.u32 %v1121, 2147483648
        %v1126 = vmul.f32 %v1124, 1.442695
        %v1127 = vpow.pop %v1126
        %v1128 = vmul.f32 %v1125, 1.442695
        %v1129 = vpow.pop %v1128
        %v1130 = vadd.f32 %v1127, 1.0
        %v1131 = vadd.f32 %v1129, 1.0
        %v1132 = vrcp.pop %v1130
        %v1133 = vmul.f32 1.0, %v1132
        %v1134 = vrcp.pop %v1131
        %v1135 = vmul.f32 1.0, %v1134
        %v1136 = vmul.f32 %v1118, %v1133
        %v1137 = vmul.f32 %v1121, %v1135
        %v1138 = vadd.f32 %v994, %v1136
        %v1139 = vadd.f32 %v995, %v1137
        %s1140 = scalar_lea.vmem %s3, 16
        %v1141 = vld [vmem:[%s1140] sm:$0xff]
        %s1142 = scalar_lea.vmem %s4, 8
        %v1143 = vld [vmem:[%s1142] sm:$0xf]
        %s1144 = scalar_lea.vmem %s5, 16
        %v1145 = vld [vmem:[%s1144] sm:$0xff]
        %s1146 = scalar_lea.vmem [#allocation7], 128
        %v1147 = vld [vmem:[%s1146] sm:$0xf]
        %v1148 = vld [vmem:[%s1146 + $0x4] sm:$0xf]
        %v1149 = vld [vmem:[%s1146 + $0x8] sm:$0xf]
        %v1150 = vld [vmem:[%s1146 + $0xc] sm:$0xf]
        %v1151 = vld [vmem:[%s1146 + $0x10] sm:$0xf]
        %v1152 = vld [vmem:[%s1146 + $0x14] sm:$0xf]
        %v1153 = vld [vmem:[%s1146 + $0x18] sm:$0xf]
        %v1154 = vld [vmem:[%s1146 + $0x1c] sm:$0xf]
        %v1155 = vld [vmem:[%s1146 + $0x20] sm:$0xf]
        %v1156 = vld [vmem:[%s1146 + $0x24] sm:$0xf]
        %v1157 = vld [vmem:[%s1146 + $0x28] sm:$0xf]
        %v1158 = vld [vmem:[%s1146 + $0x2c] sm:$0xf]
        %v1159 = vld [vmem:[%s1146 + $0x30] sm:$0xf]
        %v1160 = vld [vmem:[%s1146 + $0x34] sm:$0xf]
        %v1161 = vld [vmem:[%s1146 + $0x38] sm:$0xf]
        %v1162 = vld [vmem:[%s1146 + $0x3c] sm:$0xf]
        %1163 = vadd.xlane.f32.xlu0 %v1138
        %v1164 = vpop.xlane.xlu0 %1163
        %1165 = vadd.xlane.f32.xlu0 %v1139
        %v1166 = vpop.xlane.xlu0 %1165
        %v1167 = vmul.f32 %v1164, %v536
        %v1168 = vmul.f32 %v1166, %v536
        %v1169 = vsub.f32 %v1138, %v1167
        %v1170 = vsub.f32 %v1139, %v1168
        %v1171 = vmul.f32 %v1169, %v1169
        %v1172 = vmul.f32 %v1170, %v1170
        %1173 = vadd.xlane.f32.xlu0 %v1171
        %v1174 = vpop.xlane.xlu0 %1173
        %1175 = vadd.xlane.f32.xlu0 %v1172
        %v1176 = vpop.xlane.xlu0 %1175
        %v1177 = vmul.f32 %v1174, %v536
        %v1178 = vmul.f32 %v1176, %v536
        %v1179 = vadd.f32 %v1177, 1e-05
        %v1180 = vadd.f32 %v1178, 1e-05
        %v1181 = vrsqrt.pop %v1179
        %v1182 = vrsqrt.pop %v1180
        %v1183 = vmul.f32 %v1169, %v1181
        %v1184 = vmul.f32 %v1170, %v1182
        %v1185 = vlaneseq
        %v1186 = vshrl.u32 %v1185, 7
        %v1187 = vsub.s32 0, %v1186
        %v1188 = vrot.slane %v1141, %v1187
        %v1189 = vmul.f32 %v1183, %v1188
        %v1190 = vmul.f32 %v1184, %v1188
        %v1191 = vlaneseq
        %v1192 = vshrl.u32 %v1191, 7
        %v1193 = vsub.s32 1, %v1192
        %v1194 = vrot.slane %v1141, %v1193
        %v1195 = vadd.f32 %v1189, %v1194
        %v1196 = vadd.f32 %v1190, %v1194
        %v1197 = vpack.c.bf16 %v1196, %v1195
        %1199 = vset.pattern.permute.xlu0 0
        %1200 = vperm.xlu0 %1199, %v1145
        %v1201 = vpop.permute.xlu0 %1200
        %v1204 = vsel %vm573, %v1143, 0
        %v1207 = vsel %vm577, %v1197, 0
        %1209 = vmatprep.subr.bf16.mxu0 0
        %1210 = vmatpush1.bf16.msra.mxu0 %v1207
        %1211 = vmatprep.subr.bf16.mxu0 0
        %1212 = vmatpush1.bf16.msra.mxu0 0
        %1213 = vmatprep.subr.bf16.mxu0 0
        %1214 = vmatpush1.bf16.msra.mxu0 0
        %1215 = vmatprep.subr.bf16.mxu0 0
        %1216 = vmatpush1.bf16.msra.mxu0 0
        %1217 = vmatprep.subr.bf16.mxu0 0
        %1218 = vmatpush1.bf16.msra.mxu0 0
        %1219 = vmatprep.subr.bf16.mxu0 0
        %1220 = vmatpush1.bf16.msra.mxu0 0
        %1221 = vmatprep.subr.bf16.mxu0 0
        %1222 = vmatpush1.bf16.msra.mxu0 0
        %1223 = vmatprep.subr.bf16.mxu0 0
        %1224 = vmatpush1.bf16.msra.mxu0 0
        %1225 = vmatprep.subr.bf16.mxu0 0
        %1226 = vmatpush1.bf16.msra.mxu0 0
        %1227 = vmatprep.subr.bf16.mxu0 0
        %1228 = vmatpush1.bf16.msra.mxu0 0
        %1229 = vmatprep.subr.bf16.mxu0 0
        %1230 = vmatpush1.bf16.msra.mxu0 0
        %1231 = vmatprep.subr.bf16.mxu0 0
        %1232 = vmatpush1.bf16.msra.mxu0 0
        %1233 = vmatprep.subr.bf16.mxu0 0
        %1234 = vmatpush1.bf16.msra.mxu0 0
        %1235 = vmatprep.subr.bf16.mxu0 0
        %1236 = vmatpush1.bf16.msra.mxu0 0
        %1237 = vmatprep.subr.bf16.mxu0 0
        %1238 = vmatpush1.bf16.msra.mxu0 0
        %1239 = vmatprep.subr.bf16.mxu0 0
        %1240 = vmatpush1.bf16.msra.mxu0 0
        %1241 = vmatprep.mubr.bf16.mxu0 0
        %1242 = vmatmul.mubr.bf16.gmra.mrb[0].mxu0 %v1204
        %v1243 = vpop.f32.mrb[0].mxu0
        %v1244 = vadd.f32 %v1201, %v1243
        %v1245 = vpop.f32.mrb[0].mxu0
        %v1246 = vpop.f32.mrb[0].mxu0
        %v1247 = vpop.f32.mrb[0].mxu0
        %1248 = vdwg.mxu0
        %v1250 = vrot.slane %v1197, 4
        %v1252 = vsel %vm577, %v1250, 0
        %1254 = vmatprep.subr.bf16.mxu0 0
        %1255 = vmatpush1.bf16.msra.mxu0 %v1252
        %1256 = vmatprep.subr.bf16.mxu0 0
        %1257 = vmatpush1.bf16.msra.mxu0 0
        %1258 = vmatprep.subr.bf16.mxu0 0
        %1259 = vmatpush1.bf16.msra.mxu0 0
        %1260 = vmatprep.subr.bf16.mxu0 0
        %1261 = vmatpush1.bf16.msra.mxu0 0
        %1262 = vmatprep.subr.bf16.mxu0 0
        %1263 = vmatpush1.bf16.msra.mxu0 0
        %1264 = vmatprep.subr.bf16.mxu0 0
        %1265 = vmatpush1.bf16.msra.mxu0 0
        %1266 = vmatprep.subr.bf16.mxu0 0
        %1267 = vmatpush1.bf16.msra.mxu0 0
        %1268 = vmatprep.subr.bf16.mxu0 0
        %1269 = vmatpush1.bf16.msra.mxu0 0
        %1270 = vmatprep.subr.bf16.mxu0 0
        %1271 = vmatpush1.bf16.msra.mxu0 0
        %1272 = vmatprep.subr.bf16.mxu0 0
        %1273 = vmatpush1.bf16.msra.mxu0 0
        %1274 = vmatprep.subr.bf16.mxu0 0
        %1275 = vmatpush1.bf16.msra.mxu0 0
        %1276 = vmatprep.subr.bf16.mxu0 0
        %1277 = vmatpush1.bf16.msra.mxu0 0
        %1278 = vmatprep.subr.bf16.mxu0 0
        %1279 = vmatpush1.bf16.msra.mxu0 0
        %1280 = vmatprep.subr.bf16.mxu0 0
        %1281 = vmatpush1.bf16.msra.mxu0 0
        %1282 = vmatprep.subr.bf16.mxu0 0
        %1283 = vmatpush1.bf16.msra.mxu0 0
        %1284 = vmatprep.subr.bf16.mxu0 0
        %1285 = vmatpush1.bf16.msra.mxu0 0
        %1286 = vmatprep.mubr.bf16.mxu0 0
        %1287 = vmatmul.mubr.bf16.gmra.mrb[0].mxu0 %v1204
        %v1288 = vpop.f32.mrb[0].mxu0
        %v1289 = vadd.f32 %v1201, %v1288
        %v1290 = vpop.f32.mrb[0].mxu0
        %v1291 = vpop.f32.mrb[0].mxu0
        %v1292 = vpop.f32.mrb[0].mxu0
        %1293 = vdwg.mxu0
        %v1294 = vxor.u32 %v1244, 2147483648
        %v1295 = vxor.u32 %v1289, 2147483648
        %v1296 = vmul.f32 %v1294, 1.442695
        %v1297 = vpow.pop %v1296
        %v1298 = vmul.f32 %v1295, 1.442695
        %v1299 = vpow.pop %v1298
        %v1300 = vadd.f32 %v1297, 1.0
        %v1301 = vadd.f32 %v1299, 1.0
        %v1302 = vrcp.pop %v1300
        %v1303 = vmul.f32 1.0, %v1302
        %v1304 = vrcp.pop %v1301
        %v1305 = vmul.f32 1.0, %v1304
        %v1306 = vmul.f32 %v1244, %v1303
        %v1307 = vmul.f32 %v1289, %v1305
        %v1308 = vadd.f32 %v1138, %v1306
        %v1309 = vadd.f32 %v1139, %v1307
        %1310 = vadd.xlane.f32.xlu0 %v1308
        %v1311 = vpop.xlane.xlu0 %1310
        %1312 = vadd.xlane.f32.xlu0 %v1309
        %v1313 = vpop.xlane.xlu0 %1312
        %v1314 = vmul.f32 %v1311, %v536
        %v1315 = vmul.f32 %v1313, %v536
        %v1316 = vsub.f32 %v1308, %v1314
        %v1317 = vsub.f32 %v1309, %v1315
        %v1318 = vmul.f32 %v1316, %v1316
        %v1319 = vmul.f32 %v1317, %v1317
        %1320 = vadd.xlane.f32.xlu0 %v1318
        %v1321 = vpop.xlane.xlu0 %1320
        %1322 = vadd.xlane.f32.xlu0 %v1319
        %v1323 = vpop.xlane.xlu0 %1322
        %v1324 = vmul.f32 %v1321, %v536
        %v1325 = vmul.f32 %v1323, %v536
        %v1326 = vadd.f32 %v1324, 1e-05
        %v1327 = vadd.f32 %v1325, 1e-05
        %v1328 = vrsqrt.pop %v1326
        %v1329 = vrsqrt.pop %v1327
        %v1330 = vmul.f32 %v1316, %v1328
        %v1331 = vmul.f32 %v1317, %v1329
        %v1332 = vlaneseq
        %v1333 = vshrl.u32 %v1332, 7
        %v1334 = vsub.s32 2, %v1333
        %v1335 = vrot.slane %v1141, %v1334
        %v1336 = vmul.f32 %v1330, %v1335
        %v1337 = vmul.f32 %v1331, %v1335
        %v1338 = vlaneseq
        %v1339 = vshrl.u32 %v1338, 7
        %v1340 = vsub.s32 3, %v1339
        %v1341 = vrot.slane %v1141, %v1340
        %v1342 = vadd.f32 %v1336, %v1341
        %v1343 = vadd.f32 %v1337, %v1341
        %v1344 = vpack.c.bf16 %v1343, %v1342
        %v1345 = vlaneseq
        %v1346 = vshrl.u32 %v1345, 7
        %v1347 = vsub.s32 4, %v1346
        %v1348 = vrot.slane %v1141, %v1347
        %v1365 = vunpack.c.l.b16 %v1147
        %v1366 = vunpack.c.l.b16 %v1148
        %v1367 = vunpack.c.l.b16 %v1149
        %v1368 = vunpack.c.l.b16 %v1150
        %v1369 = vunpack.c.l.b16 %v1151
        %v1370 = vunpack.c.l.b16 %v1152
        %v1371 = vunpack.c.l.b16 %v1153
        %v1372 = vunpack.c.l.b16 %v1154
        %v1373 = vunpack.c.l.b16 %v1155
        %v1374 = vunpack.c.l.b16 %v1156
        %v1375 = vunpack.c.l.b16 %v1157
        %v1376 = vunpack.c.l.b16 %v1158
        %v1377 = vunpack.c.l.b16 %v1159
        %v1378 = vunpack.c.l.b16 %v1160
        %v1379 = vunpack.c.l.b16 %v1161
        %v1380 = vunpack.c.l.b16 %v1162
        %v1381 = vpack.c.b16 %v1366, %v1365
        %v1382 = vpack.c.b16 %v1368, %v1367
        %v1383 = vpack.c.b16 %v1370, %v1369
        %v1384 = vpack.c.b16 %v1372, %v1371
        %v1385 = vpack.c.b16 %v1374, %v1373
        %v1386 = vpack.c.b16 %v1376, %v1375
        %v1387 = vpack.c.b16 %v1378, %v1377
        %v1388 = vpack.c.b16 %v1380, %v1379
        %1397 = vmatprep.subr.bf16.mxu0 0
        %1398 = vmatpush1.bf16.msra.mxu0 %v1381
        %1399 = vmatprep.subr.bf16.mxu0 0
        %1400 = vmatpush1.bf16.msra.mxu0 %v1382
        %1401 = vmatprep.subr.bf16.mxu0 0
        %1402 = vmatpush1.bf16.msra.mxu0 %v1383
        %1403 = vmatprep.subr.bf16.mxu0 0
        %1404 = vmatpush1.bf16.msra.mxu0 %v1384
        %1405 = vmatprep.subr.bf16.mxu0 0
        %1406 = vmatpush1.bf16.msra.mxu0 %v1385
        %1407 = vmatprep.subr.bf16.mxu0 0
        %1408 = vmatpush1.bf16.msra.mxu0 %v1386
        %1409 = vmatprep.subr.bf16.mxu0 0
        %1410 = vmatpush1.bf16.msra.mxu0 %v1387
        %1411 = vmatprep.subr.bf16.mxu0 0
        %1412 = vmatpush1.bf16.msra.mxu0 %v1388
        %1413 = vmatprep.subr.bf16.mxu0 0
        %1414 = vmatpush1.bf16.msra.mxu0 0
        %1415 = vmatprep.subr.bf16.mxu0 0
        %1416 = vmatpush1.bf16.msra.mxu0 0
        %1417 = vmatprep.subr.bf16.mxu0 0
        %1418 = vmatpush1.bf16.msra.mxu0 0
        %1419 = vmatprep.subr.bf16.mxu0 0
        %1420 = vmatpush1.bf16.msra.mxu0 0
        %1421 = vmatprep.subr.bf16.mxu0 0
        %1422 = vmatpush1.bf16.msra.mxu0 0
        %1423 = vmatprep.subr.bf16.mxu0 0
        %1424 = vmatpush1.bf16.msra.mxu0 0
        %1425 = vmatprep.subr.bf16.mxu0 0
        %1426 = vmatpush1.bf16.msra.mxu0 0
        %1427 = vmatprep.subr.bf16.mxu0 0
        %1428 = vmatpush1.bf16.msra.mxu0 0
        %1429 = vmatprep.mubr.bf16.mxu0 0
        %1430 = vmatmul.mubr.bf16.gmra.mrb[0].mxu0 %v1344
        %v1431 = vpop.f32.mrb[0].mxu0
        %v1432 = vadd.f32 %v1348, %v1431
        %v1433 = vpop.f32.mrb[0].mxu0
        %v1434 = vpop.f32.mrb[0].mxu0
        %v1435 = vadd.f32 %v1348, %v1434
        %v1436 = vpop.f32.mrb[0].mxu0
        %1437 = vdwg.mxu0
        %v1438 = vxor.u32 %v1432, 2147483648
        %v1439 = vxor.u32 %v1435, 2147483648
        %v1440 = vmul.f32 %v1438, 1.442695
        %v1441 = vpow.pop %v1440
        %v1442 = vmul.f32 %v1439, 1.442695
        %v1443 = vpow.pop %v1442
        %v1444 = vadd.f32 %v1441, 1.0
        %v1445 = vadd.f32 %v1443, 1.0
        %v1446 = vrcp.pop %v1444
        %v1447 = vmul.f32 1.0, %v1446
        %v1448 = vrcp.pop %v1445
        %v1449 = vmul.f32 1.0, %v1448
        %v1450 = vmul.f32 %v1432, %v1447
        %v1451 = vmul.f32 %v1435, %v1449
        %v1452 = vadd.f32 %v1308, %v1450
        %v1453 = vadd.f32 %v1309, %v1451
        %v1454 = vld [vmem:[#allocation8] sm:$0xf]
        %v1455 = vld [vmem:[#allocation8 + $0x4] sm:$0xf]
        %v1456 = vld [vmem:[#allocation8 + $0x8] sm:$0xf]
        %v1457 = vld [vmem:[#allocation8 + $0xc] sm:$0xf]
        %v1458 = vld [vmem:[#allocation8 + $0x10] sm:$0xf]
        %v1459 = vld [vmem:[#allocation8 + $0x14] sm:$0xf]
        %v1460 = vld [vmem:[#allocation8 + $0x18] sm:$0xf]
        %v1461 = vld [vmem:[#allocation8 + $0x1c] sm:$0xf]
        %v1462 = vld [vmem:[#allocation8 + $0x20] sm:$0xf]
        %v1463 = vld [vmem:[#allocation8 + $0x24] sm:$0xf]
        %v1464 = vld [vmem:[#allocation8 + $0x28] sm:$0xf]
        %v1465 = vld [vmem:[#allocation8 + $0x2c] sm:$0xf]
        %v1466 = vld [vmem:[#allocation8 + $0x30] sm:$0xf]
        %v1467 = vld [vmem:[#allocation8 + $0x34] sm:$0xf]
        %v1468 = vld [vmem:[#allocation8 + $0x38] sm:$0xf]
        %v1469 = vld [vmem:[#allocation8 + $0x3c] sm:$0xf]
        %v1470 = vpack.c.bf16 %v1453, %v1452
        %v1471 = vld [vmem:[%s8] sm:$0x1]
        %v1473 = vlaneseq
        %v1474 = vshrl.u32 %v1473, 7
        %v1475 = vsub.s32 0, %v1474
        %v1476 = vrot.slane %v1471, %v1475
        %v1494 = vunpack.c.l.b16 %v1454
        %v1495 = vunpack.c.l.b16 %v1455
        %v1496 = vunpack.c.l.b16 %v1456
        %v1497 = vunpack.c.l.b16 %v1457
        %v1498 = vunpack.c.l.b16 %v1458
        %v1499 = vunpack.c.l.b16 %v1459
        %v1500 = vunpack.c.l.b16 %v1460
        %v1501 = vunpack.c.l.b16 %v1461
        %v1502 = vunpack.c.l.b16 %v1462
        %v1503 = vunpack.c.l.b16 %v1463
        %v1504 = vunpack.c.l.b16 %v1464
        %v1505 = vunpack.c.l.b16 %v1465
        %v1506 = vunpack.c.l.b16 %v1466
        %v1507 = vunpack.c.l.b16 %v1467
        %v1508 = vunpack.c.l.b16 %v1468
        %v1509 = vunpack.c.l.b16 %v1469
        %v1510 = vpack.c.b16 %v1495, %v1494
        %v1511 = vpack.c.b16 %v1497, %v1496
        %v1512 = vpack.c.b16 %v1499, %v1498
        %v1513 = vpack.c.b16 %v1501, %v1500
        %v1514 = vpack.c.b16 %v1503, %v1502
        %v1515 = vpack.c.b16 %v1505, %v1504
        %v1516 = vpack.c.b16 %v1507, %v1506
        %v1517 = vpack.c.b16 %v1509, %v1508
        %1526 = vmatprep.subr.bf16.mxu0 0
        %1527 = vmatpush1.bf16.msra.mxu0 %v1510
        %1528 = vmatprep.subr.bf16.mxu0 0
        %1529 = vmatpush1.bf16.msra.mxu0 %v1511
        %1530 = vmatprep.subr.bf16.mxu0 0
        %1531 = vmatpush1.bf16.msra.mxu0 %v1512
        %1532 = vmatprep.subr.bf16.mxu0 0
        %1533 = vmatpush1.bf16.msra.mxu0 %v1513
        %1534 = vmatprep.subr.bf16.mxu0 0
        %1535 = vmatpush1.bf16.msra.mxu0 %v1514
        %1536 = vmatprep.subr.bf16.mxu0 0
        %1537 = vmatpush1.bf16.msra.mxu0 %v1515
        %1538 = vmatprep.subr.bf16.mxu0 0
        %1539 = vmatpush1.bf16.msra.mxu0 %v1516
        %1540 = vmatprep.subr.bf16.mxu0 0
        %1541 = vmatpush1.bf16.msra.mxu0 %v1517
        %1542 = vmatprep.subr.bf16.mxu0 0
        %1543 = vmatpush1.bf16.msra.mxu0 0
        %1544 = vmatprep.subr.bf16.mxu0 0
        %1545 = vmatpush1.bf16.msra.mxu0 0
        %1546 = vmatprep.subr.bf16.mxu0 0
        %1547 = vmatpush1.bf16.msra.mxu0 0
        %1548 = vmatprep.subr.bf16.mxu0 0
        %1549 = vmatpush1.bf16.msra.mxu0 0
        %1550 = vmatprep.subr.bf16.mxu0 0
        %1551 = vmatpush1.bf16.msra.mxu0 0
        %1552 = vmatprep.subr.bf16.mxu0 0
        %1553 = vmatpush1.bf16.msra.mxu0 0
        %1554 = vmatprep.subr.bf16.mxu0 0
        %1555 = vmatpush1.bf16.msra.mxu0 0
        %1556 = vmatprep.subr.bf16.mxu0 0
        %1557 = vmatpush1.bf16.msra.mxu0 0
        %1558 = vmatprep.mubr.bf16.mxu0 0
        %1559 = vmatmul.mubr.bf16.gmra.mrb[0].mxu0 %v1470
        %v1560 = vpop.f32.mrb[0].mxu0
        %v1561 = vadd.f32 %v1476, %v1560
        %v1562 = vpop.f32.mrb[0].mxu0
        %v1563 = vpop.f32.mrb[0].mxu0
        %v1564 = vadd.f32 %v1476, %v1563
        %v1565 = vpop.f32.mrb[0].mxu0
        %1566 = vdwg.mxu0
        %1567 = vst [vmem:[%s394] sm:$0xff] %v1561
        %1568 = vst [vmem:[%s394 + $0x8] sm:$0xff] %v1564
        %s1569 = sand.u32 %s230, 1
        %s1570 = scalar_lea.sflag [#allocation4], %s1569
        %s1571 = sand.u32 %s230, 1
        %s1572 = smul.addr %s1571, 16
        %s1573 = scalar_lea.vmem [#allocation10], %s1572
        // Predicated region
        $region73: #{tpu_custom_call.1} parent=55 // pred_check
          %p1574 = pneg %p240
        $region74: #{tpu_custom_call.1} parent=55 // pred_check_branch
          %1576 = sbr.rel (%p1574) target = $region76
        $region75: #{tpu_custom_call.1} parent=55 // pred_region
          %s1577 = smul.u32 2, %s28
          %s1579 = ssub.s32 256, 256
          %1580 = vsyncadd %s1570, %s1579
          %s1581 = smul.addr %s1577, 128
          %s1582 = scalar_lea.hbm %s9, %s1581
          %s1583 = sshll.u32 %s1573, 4
          %s1584 = int_to_ptr.vmem [resolvable:$true] %s1583
          %1589 = dma.vmem_to_hbm [thread:$0]  %s1584, 256, %s1582, %s1570, 128, 128, 8
        $region76: #{tpu_custom_call.1} parent=55 // pred_fallthru
          _
      $region56: #{tpu_custom_call.1} parent=5 // pred_fallthru
        _
      %p1590 = scmp.le.s32.totalorder 2, %s23
      // Predicated region
      $region77: #{tpu_custom_call.1} parent=5 // pred_check
        %p1591 = pneg %p1590
      $region78: #{tpu_custom_call.1} parent=5 // pred_check_branch
        %1593 = sbr.rel (%p1591) target = $region80
      $region79: #{tpu_custom_call.1} parent=5 // pred_region
        %s1594 = ssub.s32 %s23, 2
        // Predicated region
        $region81: #{tpu_custom_call.1} parent=79 // pred_check
          %p1595 = pneg %p246
        $region82: #{tpu_custom_call.1} parent=79 // pred_check_branch
          %1597 = sbr.rel (%p1595) target = $region84
        $region83: #{tpu_custom_call.1} parent=79 // pred_region
          %s1598 = sand.u32 %s231, 1
          %s1599 = scalar_lea.sflag [#allocation4], %s1598
          %s1600 = sand.u32 %s231, 1
          %s1601 = smul.addr %s1600, 16
          %s1602 = scalar_lea.vmem [#allocation10], %s1601
          %1603 = dma.done %s1599, 256
        $region84: #{tpu_custom_call.1} parent=79 // pred_fallthru
          _
      $region80: #{tpu_custom_call.1} parent=5 // pred_fallthru
        _
    $region6: #{tpu_custom_call.1} parent=1 // loop_footer
      %s27 = sadd.s32 1, %s23
    $region7: #{tpu_custom_call.1} parent=1 // loop_footer_branch
      %22 = sbr.rel target = $region3
    $region8: #{tpu_custom_call.1} parent=1 // loop_exit
      _
    %1604 = vsyncpa [#allocation3], 1
    %s1605 = scalar_lea.sflag [#allocation3], 1
    %1606 = vsyncpa %s1605, 1
    %1607 = vsyncpa [#allocation6], 1
    %1608 = vsyncpa [#allocation9], 1
    %1609 = vsyncpa [#allocation4], 1
    %s1610 = scalar_lea.sflag [#allocation4], 1
    %1611 = vsyncpa %s1610, 1

</llo_original>
